<compile_context>
chip_gen: v7x
topology: tpu7x:2x2x1
jax: 0.10.0
libtpu: 0.0.40
codegen_flags: <defaults>
</compile_context>

<pallas_src>
import functools

import jax
import jax.numpy as jnp
from jax import lax
from jax.experimental import pallas as pl
from jax.experimental.pallas import tpu as pltpu

D_MODEL = 2048   # cross_atten d_model == kf feature dim
L_IMG = 98       # atten d_model == number of image-feature tokens
TOP_K = 98       # torch.topk(IKScore, 98, 1)
LANE = 128
LP = 128         # L_IMG padded to lane width (zero rows -> exact mean)
KP = 128         # TOP_K padded to lane width
_MIB = 1024 * 1024


def _round_up(x, m):
    return (x + m - 1) // m * m


def _pick_tile(n_pad, tile_n):
    """Largest multiple of 128 that divides n_pad and is <= tile_n."""
    tile_n = max(LANE, (tile_n // LANE) * LANE)
    t = min(tile_n, n_pad)
    while t >= LANE:
        if n_pad % t == 0:
            return t
        t -= LANE
    return LANE


def _vmem_limit(block_bytes):
    # ~3x the working set for double buffering + headroom, capped at 60% of the
    # physical per-core VMEM (64 MiB on v7x, 128 MiB on v5e/v6e).
    try:
        cap = int(getattr(pltpu.get_tpu_info(), "vmem_capacity_bytes", 64 * _MIB))
    except Exception:  # e.g. interpret mode / no TPU info available
        cap = 64 * _MIB
    return int(min(max(3 * block_bytes, 16 * _MIB), int(0.6 * cap)))


# ---------------------------------------------------------------------------
# Kernel 1 (fused): pooled[b, n] = mean_l( img[l, :] . kf[b, :, n] )
#   img_ref: (LP, D) bf16 resident     kf_ref: (D, tile) bf16
#   pooled_ref: (tile, 1) f32          (IKScore itself never hits HBM)
# ---------------------------------------------------------------------------
def _score_pool_kernel(img_ref, kf_ref, pooled_ref, *, inv_l):
    s = jnp.dot(img_ref[...], kf_ref[...],
                preferred_element_type=jnp.float32)          # (LP, tile), MXU
    # TODO(synk): self.atten = Mamba(d_model=98) would act on IKScore here; it
    # is an external module (weights not in this spec) and is treated as
    # identity, which is what lets us skip materializing IKScore in HBM.
    pooled_ref[...] = (jnp.sum(s, axis=0) * inv_l)[:, None]  # XLU reduce, free slot


def _score_pool(img, kf, tile, *, true_l):
    b, d, n_pad = kf.shape
    lp = img.shape[0]
    grid = (b, n_pad // tile)
    block_bytes = 2 * (d * tile * 2) + lp * d * 2 + lp * tile * 4
    return pl.pallas_call(
        functools.partial(_score_pool_kernel, inv_l=1.0 / true_l),
        out_shape=jax.ShapeDtypeStruct((b, n_pad, 1), jnp.float32),
        grid=grid,
        in_specs=[
            pl.BlockSpec((lp, d), lambda i, j: (0, 0)),          # resident weights
            pl.BlockSpec((None, d, tile), lambda i, j: (i, 0, j)),
        ],
        out_specs=pl.BlockSpec((None, tile, 1), lambda i, j: (i, j, 0)),
        compiler_params=pltpu.CompilerParams(
            dimension_semantics=("parallel", "parallel"),
            vmem_limit_bytes=_vmem_limit(block_bytes),
        ),
    )(img, kf)


# ---------------------------------------------------------------------------
# Kernel 2: scores = softmax(pooled, axis=1) with padded columns masked out.
# Input is only (B, N_pad) f32 (a few KB) now that pooling is fused upstream,
# so a single whole-array block is fine on every chip.
# ---------------------------------------------------------------------------
def _softmax_kernel(x_ref, o_ref, *, true_n):
    x = x_ref[...]                                            # (B, N_pad)
    col = lax.broadcasted_iota(jnp.int32, x.shape, 1)
    x = jnp.where(col < true_n, x, -jnp.inf)
    m = jnp.max(x, axis=1, keepdims=True)
    e = jnp.exp(x - m)
    o_ref[...] = e / jnp.sum(e, axis=1, keepdims=True)


def _softmax(pooled, *, true_n):
    b, n_pad = pooled.shape
    return pl.pallas_call(
        functools.partial(_softmax_kernel, true_n=true_n),
        out_shape=jax.ShapeDtypeStruct((b, n_pad), jnp.float32),
    )(pooled)


# ---------------------------------------------------------------------------
# Kernel 3: gather+scale as a one-hot MXU matmul, tiled over N w/ accumulation.
#   src_T[b, :, k] = sum_n kf[b, :, n] * (ind[b,k] == n), scaled by vtopk at end
#   kf_ref: (D, tile) bf16   ind/val: (1, KP)   o_ref: (D, KP) f32 (resident acc)
# For very large N a scalar-prefetch DMA row-gather would read fewer bytes;
# this form keeps VMEM bounded (v7x-safe) and reuses kernel-1's blocking.
# ---------------------------------------------------------------------------
def _gather_matmul_kernel(ind_ref, val_ref, kf_ref, o_ref, *, tile):
    j = pl.program_id(1)

    @pl.when(j == 0)
    def _init():
        o_ref[...] = jnp.zeros_like(o_ref)

    rows = lax.broadcasted_iota(jnp.int32, (tile, KP), 0) + j * tile
    w = (rows == ind_ref[...]).astype(kf_ref.dtype)           # one-hot (tile, KP)
    o_ref[...] += jnp.dot(kf_ref[...], w, preferred_element_type=jnp.float32)

    @pl.when(j == pl.num_programs(1) - 1)
    def _fin():
        o_ref[...] = o_ref[...] * val_ref[...]                # exact f32 scale


def _gather_matmul(ind_p, val_p, kf, tile):
    b, d, n_pad = kf.shape
    grid = (b, n_pad // tile)
    block_bytes = 2 * (d * tile * 2) + d * KP * 4 + tile * KP * 4
    return pl.pallas_call(
        functools.partial(_gather_matmul_kernel, tile=tile),
        out_shape=jax.ShapeDtypeStruct((b, d, KP), jnp.float32),
        grid=grid,
        in_specs=[
            pl.BlockSpec((None, 1, KP), lambda i, j: (i, 0, 0)),    # ind (VMEM)
            pl.BlockSpec((None, 1, KP), lambda i, j: (i, 0, 0)),    # vtopk (VMEM)
            pl.BlockSpec((None, d, tile), lambda i, j: (i, 0, j)),  # kf[b] tile
        ],
        out_specs=pl.BlockSpec((None, d, KP), lambda i, j: (i, 0, 0)),
        compiler_params=pltpu.CompilerParams(
            dimension_semantics=("parallel", "arbitrary"),
            vmem_limit_bytes=_vmem_limit(block_bytes),
        ),
    )(ind_p, val_p, kf)


# ---------------------------------------------------------------------------
# Wrapper: KGEFuseBlock.forward
# ---------------------------------------------------------------------------
def kge_fuse_block_forward(image_feature, kf, *, tile_n=1024, debug=False):
    """image_feature: (98, 2048), kf: (B, 2048, N), N >= 98 -> (B, 98, 2048)."""
    b, d, n = kf.shape
    l = image_feature.shape[0]
    assert d == image_feature.shape[1] == D_MODEL
    assert l == L_IMG and n >= TOP_K

    n_pad = _round_up(n, LANE)
    tile = _pick_tile(n_pad, tile_n)

    # bf16 compute inputs; kf stays in native (B, D, N) layout (no transpose).
    # The cast (and the N-pad, when needed) is a single fused XLA pass; passing
    # bf16 kf from the caller avoids even that round trip.
    kf_c = kf.astype(jnp.bfloat16)
    if n_pad != n:
        kf_c = jnp.pad(kf_c, ((0, 0), (0, 0), (0, n_pad - n)))
    img_c = jnp.pad(image_feature.astype(jnp.bfloat16), ((0, LP - l), (0, 0)))

    # IKScore = kf^T @ imageFeature^T, Mamba_98 (identity TODO), mean-pool:
    pooled = _score_pool(img_c, kf_c, tile, true_l=l)[..., 0]      # (B, N_pad)

    # softmax over the N axis (padded rows masked to -inf).
    scores = _softmax(pooled, true_n=n)                            # (B, N_pad)

    # torch.topk(IKScore, 98, 1): no clean Pallas TPU sort -> lax.top_k here.
    vtopk, ind = lax.top_k(scores[:, :n], TOP_K)                   # (B, 98)

    # Pad top-k to lane width; -1 never matches a row index, val 0 zeroes it.
    ind_p = jnp.pad(ind, ((0, 0), (0, KP - TOP_K)), constant_values=-1)[:, None, :]
    val_p = jnp.pad(vtopk, ((0, 0), (0, KP - TOP_K)))[:, None, :].astype(jnp.float32)

    # src^T[b] = kf[b] @ one_hot(ind[b]) * vtopk[b]   -> (B, D, 128)
    src_t = _gather_matmul(ind_p, val_p, kf_c, tile)
    # Only the tiny (2048, 128) result gets transposed/sliced (cheap in XLA).
    src = jnp.transpose(src_t, (0, 2, 1))[:, :TOP_K, :]            # (B, 98, 2048)

    # TODO(synk): self.cross_atten = Mamba(d_model=2048, ...)(imageFeature,
    # extra_emb=src) is an external custom Mamba variant; not applied here.
    if debug:
        return src, {"pooled": pooled, "scores": scores, "ind": ind, "vtopk": vtopk}
    return src


if __name__ == "__main__":
    key = jax.random.PRNGKey(0)
    k_img, k_kf = jax.random.split(key)

    B, N = 2, 256   # small; 98 / 2048 are hard-coded by the module
    image_feature = jax.random.normal(k_img, (L_IMG, D_MODEL), dtype=jnp.float32)
    kf = jax.random.normal(k_kf, (B, D_MODEL, N), dtype=jnp.float32)

    src, aux = kge_fuse_block_forward(image_feature, kf, debug=True)
    jax.block_until_ready(src)
    assert src.shape == (B, TOP_K, D_MODEL), src.shape
    assert bool(jnp.all(jnp.isfinite(src)))

    # Pure-JAX reference on the same bf16-rounded inputs.
    kf_bf = kf.astype(jnp.bfloat16).astype(jnp.float32)
    img_bf = image_feature.astype(jnp.bfloat16).astype(jnp.float32)
    kf_t = jnp.transpose(kf_bf, (0, 2, 1))                         # (B, N, D)
    ik_ref = jnp.einsum("bnd,ld->bnl", kf_t, img_bf,
                        precision=lax.Precision.HIGHEST)
    pooled_ref = jnp.mean(ik_ref, axis=-1)                         # (B, N)
    scores_ref = jax.nn.softmax(pooled_ref, axis=1)

    pooled = aux["pooled"][:, :N]
    rel = jnp.max(jnp.abs(pooled - pooled_ref)) / (jnp.max(jnp.abs(pooled_ref)) + 1e-9)
    assert float(rel) < 1e-3, float(rel)

    scores = aux["scores"][:, :N]
    assert float(jnp.max(jnp.abs(scores - scores_ref))) < 1e-4

    # Gather/scale checked against the kernel's own top-k selection
    # (avoids sensitivity to ties at the rank-98 boundary).
    ind, vtopk = aux["ind"], aux["vtopk"]
    ref_src = jnp.take_along_axis(kf_t, ind[:, :, None], axis=1) * vtopk[:, :, None]
    assert float(jnp.max(jnp.abs(src - ref_src))) < 1e-4

    print("KERNEL_OK")
</pallas_src>

<mosaic_0001>
module attributes {stable_mosaic.version = 11 : i64} {
  func.func @_score_pool_kernel(%arg0: i32, %arg1: i32, %arg2: memref<128x2048xbf16, #tpu.memory_space<vmem>>, %arg3: memref<1x2048x256xbf16, #tpu.memory_space<vmem>>, %arg4: memref<1x256x1xf32, #tpu.memory_space<vmem>>) attributes {dimension_semantics = [#tpu.dimension_semantics<parallel>, #tpu.dimension_semantics<parallel>], iteration_bounds = array<i64: 2, 1>, scalar_prefetch = 0 : i64, scratch_operands = 0 : i64, tpu.core_type = #tpu.core_type<tc>, window_params = [{pipeline_mode = #tpu.pipeline_mode<synchronous>, transform_indices = @transform_0, window_bounds = array<i64: 128, 2048>}, {transform_indices = @transform_1, window_bounds = array<i64: 1, 2048, 256>}, {transform_indices = @transform_2, window_bounds = array<i64: 1, 256, 1>}]} {
    %c0 = arith.constant 0 : index
    %c0_0 = arith.constant 0 : index
    %0 = vector.load %arg2[%c0, %c0_0] : memref<128x2048xbf16, #tpu.memory_space<vmem>>, vector<128x2048xbf16>
    %c0_1 = arith.constant 0 : index
    %c0_2 = arith.constant 0 : index
    %c0_3 = arith.constant 0 : index
    %1 = vector.load %arg3[%c0_1, %c0_2, %c0_3] : memref<1x2048x256xbf16, #tpu.memory_space<vmem>>, vector<1x2048x256xbf16>
    %2 = vector.shape_cast %1 : vector<1x2048x256xbf16> to vector<2048x256xbf16>
    %cst = arith.constant dense<0.000000e+00> : vector<128x256xf32>
    %3 = tpu.matmul %0, %2, %cst {dimension_numbers = #tpu.dot_dimension_numbers<[1], [0], [0], [1], [0, 0, 1, 1], [], []>} : vector<128x2048xbf16>, vector<2048x256xbf16>, vector<128x256xf32> -> vector<128x256xf32>
    %cst_4 = arith.constant dense<0.000000e+00> : vector<256xf32>
    %4 = vector.multi_reduction <add>, %3, %cst_4 [0] : vector<128x256xf32> to vector<256xf32>
    %cst_5 = arith.constant 0.0102040814 : f32
    %5 = vector.broadcast %cst_5 : f32 to vector<256xf32>
    %6 = arith.mulf %4, %5 : vector<256xf32>
    %7 = vector.shape_cast %6 : vector<256xf32> to vector<256x1xf32>
    %c0_6 = arith.constant 0 : index
    %c0_7 = arith.constant 0 : index
    %c0_8 = arith.constant 0 : index
    %8 = vector.load %arg4[%c0_6, %c0_7, %c0_8] : memref<1x256x1xf32, #tpu.memory_space<vmem>>, vector<1x256x1xf32>
    %9 = vector.shape_cast %8 : vector<1x256x1xf32> to vector<256x1xf32>
    %10 = vector.shape_cast %7 : vector<256x1xf32> to vector<1x256x1xf32>
    tpu.vector_store %arg4[%c0_6, %c0_7, %c0_8], %10 {strides = array<i32>} : memref<1x256x1xf32, #tpu.memory_space<vmem>>, vector<1x256x1xf32>,
    return
  }
  func.func @transform_0(%arg0: i32, %arg1: i32) -> (i32, i32) {
    %c0_i32 = arith.constant 0 : i32
    %c0_i32_0 = arith.constant 0 : i32
    %c0_i32_1 = arith.constant 0 : i32
    return %c0_i32, %c0_i32_0 : i32, i32
  }
  func.func @transform_1(%arg0: i32, %arg1: i32) -> (i32, i32, i32) {
    %c0_i32 = arith.constant 0 : i32
    %c0_i32_0 = arith.constant 0 : i32
    return %arg0, %c0_i32, %arg1 : i32, i32, i32
  }
  func.func @transform_2(%arg0: i32, %arg1: i32) -> (i32, i32, i32) {
    %c0_i32 = arith.constant 0 : i32
    %c0_i32_0 = arith.constant 0 : i32
    return %arg0, %arg1, %c0_i32 : i32, i32, i32
  }
}

</mosaic_0001>

<llo_original>
// kernel: tpu_custom_call.1
$region0: #{tpu_custom_call.1}
  #allocation0 [shape = 'u32[]', space=smem, size = 0x4, offset = 0x4, fixed_abs, tag = 'smem constant byte address 0x4 - core index']
  #allocation1 [shape = 'u32[144,128]{1,0:T(1,128)}', space=vmem, size = 0x12000, scoped, tag = 'internal scratch']
  %s0 = inlined_call_operand.hbm [shape: bf16[128,2048], index: 0, kind: input, shape index: {}]
  %s1 = inlined_call_operand.hbm [shape: bf16[2,2048,256], index: 1, kind: input, shape index: {}]
  %s2 = inlined_call_operand.vmem [shape: f32[2,256,1], index: 2, kind: output, shape index: {}]
  %s3 = sld [smem:[#allocation0]]
  $region49: #{tpu_custom_call.1} parent=0
    _
  %s5 = ssub.s32 1, %s3
  %s6 = scalar_select 0, %s5, %s3
  $region1: #{tpu_custom_call.1} parent=0
    #allocation2 [shape = 'u8[524288]{0}', space=vmem, size = 0x80000, scoped, tag = 'input window, operand 0, single buffered']
    #allocation3 [shape = 's32[2]{0}', space=sflag, size = 0x8, scoped, tag = 'scoped memory for tpu_custom_call.1']
    #allocation4 [shape = 'u8[2097152]{0}', space=vmem, size = 0x200000, scoped, tag = 'input window, operand 1']
    #allocation5 [shape = 's32[2]{0}', space=sflag, size = 0x8, scoped, tag = 'scoped memory for tpu_custom_call.1']
    %7 = vsyncpa [#allocation3], 0
    %8 = vsyncpa [#allocation5], 0
    %s9 = scalar_lea.sflag [#allocation5], 1
    %10 = vsyncpa %s9, 0
    loop: start=0, step=1, limit=4
    $region2: #{tpu_custom_call.1} parent=1 // loop_pre_header
      _
    $region3: #{tpu_custom_call.1} parent=1 // loop_header
      %s12 = sphi 0, %s16
      %p13 = scmp.ge.s32.totalorder %s12, 4
      %s19 = sphi 0, %s31
      %s20 = sphi 0, %s27
      %s21 = sphi 0, %s19
      %s22 = sphi 0, %s20
      %s23 = sphi 0, %s21
      %s24 = sphi 0, %s22
      %s32 = sphi 0, %s32
      %s34 = sphi 0, %s32
      %s35 = sphi 0, %s34
      %s49 = sphi 0, %s35
      %s57 = sphi 0, %s59
      %s60 = sphi 0, %s57
      %s61 = sphi 0, %s60
      %s77 = sphi 0, %s61
      %s85 = sphi 0, %s87
      %s88 = sphi 0, %s85
      %s89 = sphi 0, %s88
      %s105 = sphi 0, %s89
    $region4: #{tpu_custom_call.1} parent=1 // loop_header_branch
      %15 = sbr.rel (%p13) target = $region8
    $region5: #{tpu_custom_call.1} parent=1 // loop_body
      %s17 = ssub.s32 %s12, 1
      %s18 = ssub.s32 %s12, 2
      %s25 = sadd.s32 1, %s20
      %p26 = scmp.ge.s32.totalorder %s25, 1
      %s27 = scalar_select %p26, 0, %s25
      %s28 = sadd.s32 1, %s19
      %s29 = scalar_select %p26, %s28, %s19
      %p30 = scmp.ge.s32.totalorder %s29, 2
      %s31 = scalar_select %p30, 0, %s29
      %s33 = sadd.s32 %s32, 1
      %p36 = scmp.eq.s32.totalorder %s12, 1
      %p37 = scmp.ne.s32.totalorder %s32, %s34
      %p38 = scmp.eq.s32.totalorder %s12, 0
      %p39 = por %p37, %p38
      %p40 = scmp.ne.s32.totalorder %s32, %s34
      %p41 = scmp.eq.s32.totalorder %s17, 1
      %p42 = por %p40, %p41
      %p43 = scmp.ne.s32.totalorder %s34, %s35
      %p44 = scmp.eq.s32.totalorder %s17, 0
      %p45 = por %p43, %p44
      %p46 = scmp.ne.s32.totalorder %s34, %s35
      %p47 = scmp.eq.s32.totalorder %s18, 1
      %p48 = por %p46, %p47
      %p50 = scmp.ne.s32.totalorder %s35, %s49
      %p51 = scmp.eq.s32.totalorder %s18, 0
      %p52 = por %p50, %p51
      %s53 = ssub.s32 %s19, %s31
      %s54 = ssub.s32 %s20, %s27
      %s55 = sor.u32 %s53, %s54
      %p56 = scmp.eq.s32.totalorder %s55, 0
      %s58 = sadd.s32 %s57, 1
      %s59 = scalar_select %p56, %s57, %s58
      %p62 = pneg %p56
      %p63 = scmp.eq.s32.totalorder %s12, 1
      %p64 = por %p62, %p63
      %p65 = scmp.ne.s32.totalorder %s57, %s60
      %p66 = scmp.eq.s32.totalorder %s12, 0
      %p67 = por %p65, %p66
      %p68 = scmp.ne.s32.totalorder %s57, %s60
      %p69 = scmp.eq.s32.totalorder %s17, 1
      %p70 = por %p68, %p69
      %p71 = scmp.ne.s32.totalorder %s60, %s61
      %p72 = scmp.eq.s32.totalorder %s17, 0
      %p73 = por %p71, %p72
      %p74 = scmp.ne.s32.totalorder %s60, %s61
      %p75 = scmp.eq.s32.totalorder %s18, 1
      %p76 = por %p74, %p75
      %p78 = scmp.ne.s32.totalorder %s61, %s77
      %p79 = scmp.eq.s32.totalorder %s18, 0
      %p80 = por %p78, %p79
      %s81 = ssub.s32 %s19, %s31
      %s82 = ssub.s32 %s20, %s27
      %s83 = sor.u32 %s81, %s82
      %p84 = scmp.eq.s32.totalorder %s83, 0
      %s86 = sadd.s32 %s85, 1
      %s87 = scalar_select %p84, %s85, %s86
      %p90 = pneg %p84
      %p91 = scmp.eq.s32.totalorder %s12, 1
      %p92 = por %p90, %p91
      %p93 = scmp.ne.s32.totalorder %s85, %s88
      %p94 = scmp.eq.s32.totalorder %s12, 0
      %p95 = por %p93, %p94
      %p96 = scmp.ne.s32.totalorder %s85, %s88
      %p97 = scmp.eq.s32.totalorder %s17, 1
      %p98 = por %p96, %p97
      %p99 = scmp.ne.s32.totalorder %s88, %s89
      %p100 = scmp.eq.s32.totalorder %s17, 0
      %p101 = por %p99, %p100
      %p102 = scmp.ne.s32.totalorder %s88, %s89
      %p103 = scmp.eq.s32.totalorder %s18, 1
      %p104 = por %p102, %p103
      %p106 = scmp.ne.s32.totalorder %s89, %s105
      %p107 = scmp.eq.s32.totalorder %s18, 0
      %p108 = por %p106, %p107
      %p109 = scmp.le.s32.totalorder 1, %s12
      %p110 = scmp.lt.s32.totalorder %s12, 3
      %p111 = pnand %p109, %p110
      %p112 = pneg %p111
      // Predicated region
      $region9: #{tpu_custom_call.1} parent=5 // pred_check
        _
      $region10: #{tpu_custom_call.1} parent=5 // pred_check_branch
        %114 = sbr.rel (%p111) target = $region12
      $region11: #{tpu_custom_call.1} parent=5 // pred_region
        %s115 = ssub.s32 %s12, 1
        // Predicated region
        $region13: #{tpu_custom_call.1} parent=11 // pred_check
          %p116 = pneg %p45
        $region14: #{tpu_custom_call.1} parent=11 // pred_check_branch
          %118 = sbr.rel (%p116) target = $region16
        $region15: #{tpu_custom_call.1} parent=11 // pred_region
          %s120 = ssub.s32 16384, 16384
          %121 = vsyncadd [#allocation3], %s120
          %s122 = sshll.u32 [#allocation2], 4
          %s123 = int_to_ptr.vmem [resolvable:$true] %s122
          %128 = dma.hbm_to_vmem [thread:$0]  %s0, 16384, %s123, [#allocation3], 1024, 1024, 64
        $region16: #{tpu_custom_call.1} parent=11 // pred_fallthru
          _
      $region12: #{tpu_custom_call.1} parent=5 // pred_fallthru
        _
      %p129 = scmp.lt.s32.totalorder %s12, 2
      // Predicated region
      $region17: #{tpu_custom_call.1} parent=5 // pred_check
        %p130 = pneg %p129
      $region18: #{tpu_custom_call.1} parent=5 // pred_check_branch
        %132 = sbr.rel (%p130) target = $region20
      $region19: #{tpu_custom_call.1} parent=5 // pred_region
        // Predicated region
        $region21: #{tpu_custom_call.1} parent=19 // pred_check
          %p133 = pneg %p67
        $region22: #{tpu_custom_call.1} parent=19 // pred_check_branch
          %135 = sbr.rel (%p133) target = $region24
        $region23: #{tpu_custom_call.1} parent=19 // pred_region
          %s136 = sand.u32 %s57, 1
          %s137 = scalar_lea.sflag [#allocation5], %s136
          %s138 = sand.u32 %s57, 1
          %s139 = smul.addr %s138, 2048
          %s140 = scalar_lea.vmem [#allocation4], %s139
          %s141 = smul.u32 2, %s20
          %s143 = ssub.s32 32768, 32768
          %144 = vsyncadd %s137, %s143
          %s145 = smul.addr %s19, 512
          %s146 = sadd.s32 %s141, %s145
          %s147 = smul.addr %s146, 64
          %s148 = scalar_lea.hbm %s1, %s147
          %s149 = sshll.u32 %s140, 4
          %s150 = int_to_ptr.vmem [resolvable:$true] %s149
          %155 = dma.hbm_to_vmem [thread:$0]  %s148, 32768, %s150, %s137, 128, 128, 8
        $region24: #{tpu_custom_call.1} parent=19 // pred_fallthru
          _
      $region20: #{tpu_custom_call.1} parent=5 // pred_fallthru
        _
      %p156 = scmp.le.s32.totalorder 1, %s12
      %p157 = scmp.lt.s32.totalorder %s12, 3
      %p158 = pnand %p156, %p157
      %p159 = pneg %p158
      // Predicated region
      $region25: #{tpu_custom_call.1} parent=5 // pred_check
        _
      $region26: #{tpu_custom_call.1} parent=5 // pred_check_branch
        %161 = sbr.rel (%p158) target = $region28
      $region27: #{tpu_custom_call.1} parent=5 // pred_region
        %s162 = ssub.s32 %s12, 1
        // Predicated region
        $region29: #{tpu_custom_call.1} parent=27 // pred_check
          %p163 = pneg %p45
        $region30: #{tpu_custom_call.1} parent=27 // pred_check_branch
          %165 = sbr.rel (%p163) target = $region32
        $region31: #{tpu_custom_call.1} parent=27 // pred_region
          %166 = dma.done [#allocation3], 16384
        $region32: #{tpu_custom_call.1} parent=27 // pred_fallthru
          _
        %s167 = sand.u32 %s60, 1
        %s168 = scalar_lea.sflag [#allocation5], %s167
        %s169 = sand.u32 %s60, 1
        %s170 = smul.addr %s169, 2048
        %s171 = scalar_lea.vmem [#allocation4], %s170
        // Predicated region
        $region33: #{tpu_custom_call.1} parent=27 // pred_check
          %p172 = pneg %p73
        $region34: #{tpu_custom_call.1} parent=27 // pred_check_branch
          %174 = sbr.rel (%p172) target = $region36
        $region35: #{tpu_custom_call.1} parent=27 // pred_region
          %175 = dma.done %s168, 32768
        $region36: #{tpu_custom_call.1} parent=27 // pred_fallthru
          _
        %p176 = pneg %p45
        %p177 = pneg %p42
        %s178 = sand.u32 %s60, 1
        %s179 = scalar_lea.sflag [#allocation5], %s178
        %s180 = sand.u32 %s60, 1
        %s181 = smul.addr %s180, 2048
        %s182 = scalar_lea.vmem [#allocation4], %s181
        %p183 = pneg %p73
        %p184 = pneg %p70
        %p185 = pneg %p101
        %p186 = pneg %p98
        %s187 = smul.u32 32, %s22
        %p188 = scmp.lt.s32.totalorder %s21, 1
        %s189 = scalar_select %p188, %s21, 1
        %p190 = scmp.lt.s32.totalorder %s187, 31
        %s191 = scalar_select %p190, %s187, 31
        %s192 = smul.addr %s189, 32
        %s193 = sadd.s32 %s191, %s192
        %s194 = smul.addr %s193, 8
        %s195 = scalar_lea.vmem %s2, %s194
        %s196 = smul.u32 2, %s22
        %s197 = smul.u32 32, %s22
        %p198 = scmp.lt.s32.totalorder %s21, 1
        %s199 = scalar_select %p198, %s21, 1
        %p200 = scmp.lt.s32.totalorder %s197, 31
        %s201 = scalar_select %p200, %s197, 31
        %s202 = smul.addr %s199, 32
        %s203 = sadd.s32 %s201, %s202
        %s204 = smul.addr %s203, 8
        %s205 = scalar_lea.vmem %s2, %s204
        %s206 = smul.u32 32, %s22
        %v207 = vld [vmem:[#allocation2] sm:$0xff]
        %v208 = vld [vmem:[#allocation2 + $0x8] sm:$0xff]
        %v209 = vld [vmem:[#allocation2 + $0x10] sm:$0xff]
        %v210 = vld [vmem:[#allocation2 + $0x18] sm:$0xff]
        %v211 = vld [vmem:[#allocation2 + $0x20] sm:$0xff]
        %v212 = vld [vmem:[#allocation2 + $0x28] sm:$0xff]
        %v213 = vld [vmem:[#allocation2 + $0x30] sm:$0xff]
        %v214 = vld [vmem:[#allocation2 + $0x38] sm:$0xff]
        %v215 = vld [vmem:[#allocation2 + $0x40] sm:$0xff]
        %v216 = vld [vmem:[#allocation2 + $0x48] sm:$0xff]
        %v217 = vld [vmem:[#allocation2 + $0x50] sm:$0xff]
        %v218 = vld [vmem:[#allocation2 + $0x58] sm:$0xff]
        %v219 = vld [vmem:[#allocation2 + $0x60] sm:$0xff]
        %v220 = vld [vmem:[#allocation2 + $0x68] sm:$0xff]
        %v221 = vld [vmem:[#allocation2 + $0x70] sm:$0xff]
        %v222 = vld [vmem:[#allocation2 + $0x78] sm:$0xff]
        %v223 = vld [vmem:[#allocation2 + $0x80] sm:$0xff]
        %v224 = vld [vmem:[#allocation2 + $0x88] sm:$0xff]
        %v225 = vld [vmem:[#allocation2 + $0x90] sm:$0xff]
        %v226 = vld [vmem:[#allocation2 + $0x98] sm:$0xff]
        %v227 = vld [vmem:[#allocation2 + $0xa0] sm:$0xff]
        %v228 = vld [vmem:[#allocation2 + $0xa8] sm:$0xff]
        %v229 = vld [vmem:[#allocation2 + $0xb0] sm:$0xff]
        %v230 = vld [vmem:[#allocation2 + $0xb8] sm:$0xff]
        %v231 = vld [vmem:[#allocation2 + $0xc0] sm:$0xff]
        %v232 = vld [vmem:[#allocation2 + $0xc8] sm:$0xff]
        %v233 = vld [vmem:[#allocation2 + $0xd0] sm:$0xff]
        %v234 = vld [vmem:[#allocation2 + $0xd8] sm:$0xff]
        %v235 = vld [vmem:[#allocation2 + $0xe0] sm:$0xff]
        %v236 = vld [vmem:[#allocation2 + $0xe8] sm:$0xff]
        %v237 = vld [vmem:[#allocation2 + $0xf0] sm:$0xff]
        %v238 = vld [vmem:[#allocation2 + $0xf8] sm:$0xff]
        %v239 = vld [vmem:[#allocation2 + $0x100] sm:$0xff]
        %v240 = vld [vmem:[#allocation2 + $0x108] sm:$0xff]
        %v241 = vld [vmem:[#allocation2 + $0x110] sm:$0xff]
        %v242 = vld [vmem:[#allocation2 + $0x118] sm:$0xff]
        %v243 = vld [vmem:[#allocation2 + $0x120] sm:$0xff]
        %v244 = vld [vmem:[#allocation2 + $0x128] sm:$0xff]
        %v245 = vld [vmem:[#allocation2 + $0x130] sm:$0xff]
        %v246 = vld [vmem:[#allocation2 + $0x138] sm:$0xff]
        %v247 = vld [vmem:[#allocation2 + $0x140] sm:$0xff]
        %v248 = vld [vmem:[#allocation2 + $0x148] sm:$0xff]
        %v249 = vld [vmem:[#allocation2 + $0x150] sm:$0xff]
        %v250 = vld [vmem:[#allocation2 + $0x158] sm:$0xff]
        %v251 = vld [vmem:[#allocation2 + $0x160] sm:$0xff]
        %v252 = vld [vmem:[#allocation2 + $0x168] sm:$0xff]
        %v253 = vld [vmem:[#allocation2 + $0x170] sm:$0xff]
        %v254 = vld [vmem:[#allocation2 + $0x178] sm:$0xff]
        %v255 = vld [vmem:[#allocation2 + $0x180] sm:$0xff]
        %v256 = vld [vmem:[#allocation2 + $0x188] sm:$0xff]
        %v257 = vld [vmem:[#allocation2 + $0x190] sm:$0xff]
        %v258 = vld [vmem:[#allocation2 + $0x198] sm:$0xff]
        %v259 = vld [vmem:[#allocation2 + $0x1a0] sm:$0xff]
        %v260 = vld [vmem:[#allocation2 + $0x1a8] sm:$0xff]
        %v261 = vld [vmem:[#allocation2 + $0x1b0] sm:$0xff]
        %v262 = vld [vmem:[#allocation2 + $0x1b8] sm:$0xff]
        %v263 = vld [vmem:[#allocation2 + $0x1c0] sm:$0xff]
        %v264 = vld [vmem:[#allocation2 + $0x1c8] sm:$0xff]
        %v265 = vld [vmem:[#allocation2 + $0x1d0] sm:$0xff]
        %v266 = vld [vmem:[#allocation2 + $0x1d8] sm:$0xff]
        %v267 = vld [vmem:[#allocation2 + $0x1e0] sm:$0xff]
        %v268 = vld [vmem:[#allocation2 + $0x1e8] sm:$0xff]
        %v269 = vld [vmem:[#allocation2 + $0x1f0] sm:$0xff]
        %v270 = vld [vmem:[#allocation2 + $0x1f8] sm:$0xff]
        %v271 = vld [vmem:[#allocation2 + $0x200] sm:$0xff]
        %v272 = vld [vmem:[#allocation2 + $0x208] sm:$0xff]
        %v273 = vld [vmem:[#allocation2 + $0x210] sm:$0xff]
        %v274 = vld [vmem:[#allocation2 + $0x218] sm:$0xff]
        %v275 = vld [vmem:[#allocation2 + $0x220] sm:$0xff]
        %v276 = vld [vmem:[#allocation2 + $0x228] sm:$0xff]
        %v277 = vld [vmem:[#allocation2 + $0x230] sm:$0xff]
        %v278 = vld [vmem:[#allocation2 + $0x238] sm:$0xff]
        %v279 = vld [vmem:[#allocation2 + $0x240] sm:$0xff]
        %v280 = vld [vmem:[#allocation2 + $0x248] sm:$0xff]
        %v281 = vld [vmem:[#allocation2 + $0x250] sm:$0xff]
        %v282 = vld [vmem:[#allocation2 + $0x258] sm:$0xff]
        %v283 = vld [vmem:[#allocation2 + $0x260] sm:$0xff]
        %v284 = vld [vmem:[#allocation2 + $0x268] sm:$0xff]
        %v285 = vld [vmem:[#allocation2 + $0x270] sm:$0xff]
        %v286 = vld [vmem:[#allocation2 + $0x278] sm:$0xff]
        %v287 = vld [vmem:[#allocation2 + $0x280] sm:$0xff]
        %v288 = vld [vmem:[#allocation2 + $0x288] sm:$0xff]
        %v289 = vld [vmem:[#allocation2 + $0x290] sm:$0xff]
        %v290 = vld [vmem:[#allocation2 + $0x298] sm:$0xff]
        %v291 = vld [vmem:[#allocation2 + $0x2a0] sm:$0xff]
        %v292 = vld [vmem:[#allocation2 + $0x2a8] sm:$0xff]
        %v293 = vld [vmem:[#allocation2 + $0x2b0] sm:$0xff]
        %v294 = vld [vmem:[#allocation2 + $0x2b8] sm:$0xff]
        %v295 = vld [vmem:[#allocation2 + $0x2c0] sm:$0xff]
        %v296 = vld [vmem:[#allocation2 + $0x2c8] sm:$0xff]
        %v297 = vld [vmem:[#allocation2 + $0x2d0] sm:$0xff]
        %v298 = vld [vmem:[#allocation2 + $0x2d8] sm:$0xff]
        %v299 = vld [vmem:[#allocation2 + $0x2e0] sm:$0xff]
        %v300 = vld [vmem:[#allocation2 + $0x2e8] sm:$0xff]
        %v301 = vld [vmem:[#allocation2 + $0x2f0] sm:$0xff]
        %v302 = vld [vmem:[#allocation2 + $0x2f8] sm:$0xff]
        %v303 = vld [vmem:[#allocation2 + $0x300] sm:$0xff]
        %v304 = vld [vmem:[#allocation2 + $0x308] sm:$0xff]
        %v305 = vld [vmem:[#allocation2 + $0x310] sm:$0xff]
        %v306 = vld [vmem:[#allocation2 + $0x318] sm:$0xff]
        %v307 = vld [vmem:[#allocation2 + $0x320] sm:$0xff]
        %v308 = vld [vmem:[#allocation2 + $0x328] sm:$0xff]
        %v309 = vld [vmem:[#allocation2 + $0x330] sm:$0xff]
        %v310 = vld [vmem:[#allocation2 + $0x338] sm:$0xff]
        %v311 = vld [vmem:[#allocation2 + $0x340] sm:$0xff]
        %v312 = vld [vmem:[#allocation2 + $0x348] sm:$0xff]
        %v313 = vld [vmem:[#allocation2 + $0x350] sm:$0xff]
        %v314 = vld [vmem:[#allocation2 + $0x358] sm:$0xff]
        %v315 = vld [vmem:[#allocation2 + $0x360] sm:$0xff]
        %v316 = vld [vmem:[#allocation2 + $0x368] sm:$0xff]
        %v317 = vld [vmem:[#allocation2 + $0x370] sm:$0xff]
        %v318 = vld [vmem:[#allocation2 + $0x378] sm:$0xff]
        %v319 = vld [vmem:[#allocation2 + $0x380] sm:$0xff]
        %v320 = vld [vmem:[#allocation2 + $0x388] sm:$0xff]
        %v321 = vld [vmem:[#allocation2 + $0x390] sm:$0xff]
        %v322 = vld [vmem:[#allocation2 + $0x398] sm:$0xff]
        %v323 = vld [vmem:[#allocation2 + $0x3a0] sm:$0xff]
        %v324 = vld [vmem:[#allocation2 + $0x3a8] sm:$0xff]
        %v325 = vld [vmem:[#allocation2 + $0x3b0] sm:$0xff]
        %v326 = vld [vmem:[#allocation2 + $0x3b8] sm:$0xff]
        %v327 = vld [vmem:[#allocation2 + $0x3c0] sm:$0xff]
        %v328 = vld [vmem:[#allocation2 + $0x3c8] sm:$0xff]
        %v329 = vld [vmem:[#allocation2 + $0x3d0] sm:$0xff]
        %v330 = vld [vmem:[#allocation2 + $0x3d8] sm:$0xff]
        %v331 = vld [vmem:[#allocation2 + $0x3e0] sm:$0xff]
        %v332 = vld [vmem:[#allocation2 + $0x3e8] sm:$0xff]
        %v333 = vld [vmem:[#allocation2 + $0x3f0] sm:$0xff]
        %v334 = vld [vmem:[#allocation2 + $0x3f8] sm:$0xff]
        %v335 = vld [vmem:[%s171] sm:$0xff]
        %v336 = vld [vmem:[%s171 + $0x8] sm:$0xff]
        %v337 = vld [vmem:[%s171 + $0x10] sm:$0xff]
        %v338 = vld [vmem:[%s171 + $0x18] sm:$0xff]
        %v339 = vld [vmem:[%s171 + $0x20] sm:$0xff]
        %v340 = vld [vmem:[%s171 + $0x28] sm:$0xff]
        %v341 = vld [vmem:[%s171 + $0x30] sm:$0xff]
        %v342 = vld [vmem:[%s171 + $0x38] sm:$0xff]
        %v343 = vld [vmem:[%s171 + $0x40] sm:$0xff]
        %v344 = vld [vmem:[%s171 + $0x48] sm:$0xff]
        %v345 = vld [vmem:[%s171 + $0x50] sm:$0xff]
        %v346 = vld [vmem:[%s171 + $0x58] sm:$0xff]
        %v347 = vld [vmem:[%s171 + $0x60] sm:$0xff]
        %v348 = vld [vmem:[%s171 + $0x68] sm:$0xff]
        %v349 = vld [vmem:[%s171 + $0x70] sm:$0xff]
        %v350 = vld [vmem:[%s171 + $0x78] sm:$0xff]
        %v351 = vld [vmem:[%s171 + $0x80] sm:$0xff]
        %v352 = vld [vmem:[%s171 + $0x88] sm:$0xff]
        %v353 = vld [vmem:[%s171 + $0x90] sm:$0xff]
        %v354 = vld [vmem:[%s171 + $0x98] sm:$0xff]
        %v355 = vld [vmem:[%s171 + $0xa0] sm:$0xff]
        %v356 = vld [vmem:[%s171 + $0xa8] sm:$0xff]
        %v357 = vld [vmem:[%s171 + $0xb0] sm:$0xff]
        %v358 = vld [vmem:[%s171 + $0xb8] sm:$0xff]
        %v359 = vld [vmem:[%s171 + $0xc0] sm:$0xff]
        %v360 = vld [vmem:[%s171 + $0xc8] sm:$0xff]
        %v361 = vld [vmem:[%s171 + $0xd0] sm:$0xff]
        %v362 = vld [vmem:[%s171 + $0xd8] sm:$0xff]
        %v363 = vld [vmem:[%s171 + $0xe0] sm:$0xff]
        %v364 = vld [vmem:[%s171 + $0xe8] sm:$0xff]
        %v365 = vld [vmem:[%s171 + $0xf0] sm:$0xff]
        %v366 = vld [vmem:[%s171 + $0xf8] sm:$0xff]
        %v367 = vld [vmem:[%s171 + $0x100] sm:$0xff]
        %v368 = vld [vmem:[%s171 + $0x108] sm:$0xff]
        %v369 = vld [vmem:[%s171 + $0x110] sm:$0xff]
        %v370 = vld [vmem:[%s171 + $0x118] sm:$0xff]
        %v371 = vld [vmem:[%s171 + $0x120] sm:$0xff]
        %v372 = vld [vmem:[%s171 + $0x128] sm:$0xff]
        %v373 = vld [vmem:[%s171 + $0x130] sm:$0xff]
        %v374 = vld [vmem:[%s171 + $0x138] sm:$0xff]
        %v375 = vld [vmem:[%s171 + $0x140] sm:$0xff]
        %v376 = vld [vmem:[%s171 + $0x148] sm:$0xff]
        %v377 = vld [vmem:[%s171 + $0x150] sm:$0xff]
        %v378 = vld [vmem:[%s171 + $0x158] sm:$0xff]
        %v379 = vld [vmem:[%s171 + $0x160] sm:$0xff]
        %v380 = vld [vmem:[%s171 + $0x168] sm:$0xff]
        %v381 = vld [vmem:[%s171 + $0x170] sm:$0xff]
        %v382 = vld [vmem:[%s171 + $0x178] sm:$0xff]
        %v383 = vld [vmem:[%s171 + $0x180] sm:$0xff]
        %v384 = vld [vmem:[%s171 + $0x188] sm:$0xff]
        %v385 = vld [vmem:[%s171 + $0x190] sm:$0xff]
        %v386 = vld [vmem:[%s171 + $0x198] sm:$0xff]
        %v387 = vld [vmem:[%s171 + $0x1a0] sm:$0xff]
        %v388 = vld [vmem:[%s171 + $0x1a8] sm:$0xff]
        %v389 = vld [vmem:[%s171 + $0x1b0] sm:$0xff]
        %v390 = vld [vmem:[%s171 + $0x1b8] sm:$0xff]
        %v391 = vld [vmem:[%s171 + $0x1c0] sm:$0xff]
        %v392 = vld [vmem:[%s171 + $0x1c8] sm:$0xff]
        %v393 = vld [vmem:[%s171 + $0x1d0] sm:$0xff]
        %v394 = vld [vmem:[%s171 + $0x1d8] sm:$0xff]
        %v395 = vld [vmem:[%s171 + $0x1e0] sm:$0xff]
        %v396 = vld [vmem:[%s171 + $0x1e8] sm:$0xff]
        %v397 = vld [vmem:[%s171 + $0x1f0] sm:$0xff]
        %v398 = vld [vmem:[%s171 + $0x1f8] sm:$0xff]
        %v399 = vld [vmem:[%s171 + $0x200] sm:$0xff]
        %v400 = vld [vmem:[%s171 + $0x208] sm:$0xff]
        %v401 = vld [vmem:[%s171 + $0x210] sm:$0xff]
        %v402 = vld [vmem:[%s171 + $0x218] sm:$0xff]
        %v403 = vld [vmem:[%s171 + $0x220] sm:$0xff]
        %v404 = vld [vmem:[%s171 + $0x228] sm:$0xff]
        %v405 = vld [vmem:[%s171 + $0x230] sm:$0xff]
        %v406 = vld [vmem:[%s171 + $0x238] sm:$0xff]
        %v407 = vld [vmem:[%s171 + $0x240] sm:$0xff]
        %v408 = vld [vmem:[%s171 + $0x248] sm:$0xff]
        %v409 = vld [vmem:[%s171 + $0x250] sm:$0xff]
        %v410 = vld [vmem:[%s171 + $0x258] sm:$0xff]
        %v411 = vld [vmem:[%s171 + $0x260] sm:$0xff]
        %v412 = vld [vmem:[%s171 + $0x268] sm:$0xff]
        %v413 = vld [vmem:[%s171 + $0x270] sm:$0xff]
        %v414 = vld [vmem:[%s171 + $0x278] sm:$0xff]
        %v415 = vld [vmem:[%s171 + $0x280] sm:$0xff]
        %v416 = vld [vmem:[%s171 + $0x288] sm:$0xff]
        %v417 = vld [vmem:[%s171 + $0x290] sm:$0xff]
        %v418 = vld [vmem:[%s171 + $0x298] sm:$0xff]
        %v419 = vld [vmem:[%s171 + $0x2a0] sm:$0xff]
        %v420 = vld [vmem:[%s171 + $0x2a8] sm:$0xff]
        %v421 = vld [vmem:[%s171 + $0x2b0] sm:$0xff]
        %v422 = vld [vmem:[%s171 + $0x2b8] sm:$0xff]
        %v423 = vld [vmem:[%s171 + $0x2c0] sm:$0xff]
        %v424 = vld [vmem:[%s171 + $0x2c8] sm:$0xff]
        %v425 = vld [vmem:[%s171 + $0x2d0] sm:$0xff]
        %v426 = vld [vmem:[%s171 + $0x2d8] sm:$0xff]
        %v427 = vld [vmem:[%s171 + $0x2e0] sm:$0xff]
        %v428 = vld [vmem:[%s171 + $0x2e8] sm:$0xff]
        %v429 = vld [vmem:[%s171 + $0x2f0] sm:$0xff]
        %v430 = vld [vmem:[%s171 + $0x2f8] sm:$0xff]
        %v431 = vld [vmem:[%s171 + $0x300] sm:$0xff]
        %v432 = vld [vmem:[%s171 + $0x308] sm:$0xff]
        %v433 = vld [vmem:[%s171 + $0x310] sm:$0xff]
        %v434 = vld [vmem:[%s171 + $0x318] sm:$0xff]
        %v435 = vld [vmem:[%s171 + $0x320] sm:$0xff]
        %v436 = vld [vmem:[%s171 + $0x328] sm:$0xff]
        %v437 = vld [vmem:[%s171 + $0x330] sm:$0xff]
        %v438 = vld [vmem:[%s171 + $0x338] sm:$0xff]
        %v439 = vld [vmem:[%s171 + $0x340] sm:$0xff]
        %v440 = vld [vmem:[%s171 + $0x348] sm:$0xff]
        %v441 = vld [vmem:[%s171 + $0x350] sm:$0xff]
        %v442 = vld [vmem:[%s171 + $0x358] sm:$0xff]
        %v443 = vld [vmem:[%s171 + $0x360] sm:$0xff]
        %v444 = vld [vmem:[%s171 + $0x368] sm:$0xff]
        %v445 = vld [vmem:[%s171 + $0x370] sm:$0xff]
        %v446 = vld [vmem:[%s171 + $0x378] sm:$0xff]
        %v447 = vld [vmem:[%s171 + $0x380] sm:$0xff]
        %v448 = vld [vmem:[%s171 + $0x388] sm:$0xff]
        %v449 = vld [vmem:[%s171 + $0x390] sm:$0xff]
        %v450 = vld [vmem:[%s171 + $0x398] sm:$0xff]
        %v451 = vld [vmem:[%s171 + $0x3a0] sm:$0xff]
        %v452 = vld [vmem:[%s171 + $0x3a8] sm:$0xff]
        %v453 = vld [vmem:[%s171 + $0x3b0] sm:$0xff]
        %v454 = vld [vmem:[%s171 + $0x3b8] sm:$0xff]
        %v455 = vld [vmem:[%s171 + $0x3c0] sm:$0xff]
        %v456 = vld [vmem:[%s171 + $0x3c8] sm:$0xff]
        %v457 = vld [vmem:[%s171 + $0x3d0] sm:$0xff]
        %v458 = vld [vmem:[%s171 + $0x3d8] sm:$0xff]
        %v459 = vld [vmem:[%s171 + $0x3e0] sm:$0xff]
        %v460 = vld [vmem:[%s171 + $0x3e8] sm:$0xff]
        %v461 = vld [vmem:[%s171 + $0x3f0] sm:$0xff]
        %v462 = vld [vmem:[%s171 + $0x3f8] sm:$0xff]
        %v463 = vld [vmem:[%s171 + $0x400] sm:$0xff]
        %v464 = vld [vmem:[%s171 + $0x408] sm:$0xff]
        %v465 = vld [vmem:[%s171 + $0x410] sm:$0xff]
        %v466 = vld [vmem:[%s171 + $0x418] sm:$0xff]
        %v467 = vld [vmem:[%s171 + $0x420] sm:$0xff]
        %v468 = vld [vmem:[%s171 + $0x428] sm:$0xff]
        %v469 = vld [vmem:[%s171 + $0x430] sm:$0xff]
        %v470 = vld [vmem:[%s171 + $0x438] sm:$0xff]
        %v471 = vld [vmem:[%s171 + $0x440] sm:$0xff]
        %v472 = vld [vmem:[%s171 + $0x448] sm:$0xff]
        %v473 = vld [vmem:[%s171 + $0x450] sm:$0xff]
        %v474 = vld [vmem:[%s171 + $0x458] sm:$0xff]
        %v475 = vld [vmem:[%s171 + $0x460] sm:$0xff]
        %v476 = vld [vmem:[%s171 + $0x468] sm:$0xff]
        %v477 = vld [vmem:[%s171 + $0x470] sm:$0xff]
        %v478 = vld [vmem:[%s171 + $0x478] sm:$0xff]
        %v479 = vld [vmem:[%s171 + $0x480] sm:$0xff]
        %v480 = vld [vmem:[%s171 + $0x488] sm:$0xff]
        %v481 = vld [vmem:[%s171 + $0x490] sm:$0xff]
        %v482 = vld [vmem:[%s171 + $0x498] sm:$0xff]
        %v483 = vld [vmem:[%s171 + $0x4a0] sm:$0xff]
        %v484 = vld [vmem:[%s171 + $0x4a8] sm:$0xff]
        %v485 = vld [vmem:[%s171 + $0x4b0] sm:$0xff]
        %v486 = vld [vmem:[%s171 + $0x4b8] sm:$0xff]
        %v487 = vld [vmem:[%s171 + $0x4c0] sm:$0xff]
        %v488 = vld [vmem:[%s171 + $0x4c8] sm:$0xff]
        %v489 = vld [vmem:[%s171 + $0x4d0] sm:$0xff]
        %v490 = vld [vmem:[%s171 + $0x4d8] sm:$0xff]
        %v491 = vld [vmem:[%s171 + $0x4e0] sm:$0xff]
        %v492 = vld [vmem:[%s171 + $0x4e8] sm:$0xff]
        %v493 = vld [vmem:[%s171 + $0x4f0] sm:$0xff]
        %v494 = vld [vmem:[%s171 + $0x4f8] sm:$0xff]
        %v495 = vld [vmem:[%s171 + $0x500] sm:$0xff]
        %v496 = vld [vmem:[%s171 + $0x508] sm:$0xff]
        %v497 = vld [vmem:[%s171 + $0x510] sm:$0xff]
        %v498 = vld [vmem:[%s171 + $0x518] sm:$0xff]
        %v499 = vld [vmem:[%s171 + $0x520] sm:$0xff]
        %v500 = vld [vmem:[%s171 + $0x528] sm:$0xff]
        %v501 = vld [vmem:[%s171 + $0x530] sm:$0xff]
        %v502 = vld [vmem:[%s171 + $0x538] sm:$0xff]
        %v503 = vld [vmem:[%s171 + $0x540] sm:$0xff]
        %v504 = vld [vmem:[%s171 + $0x548] sm:$0xff]
        %v505 = vld [vmem:[%s171 + $0x550] sm:$0xff]
        %v506 = vld [vmem:[%s171 + $0x558] sm:$0xff]
        %v507 = vld [vmem:[%s171 + $0x560] sm:$0xff]
        %v508 = vld [vmem:[%s171 + $0x568] sm:$0xff]
        %v509 = vld [vmem:[%s171 + $0x570] sm:$0xff]
        %v510 = vld [vmem:[%s171 + $0x578] sm:$0xff]
        %v511 = vld [vmem:[%s171 + $0x580] sm:$0xff]
        %v512 = vld [vmem:[%s171 + $0x588] sm:$0xff]
        %v513 = vld [vmem:[%s171 + $0x590] sm:$0xff]
        %v514 = vld [vmem:[%s171 + $0x598] sm:$0xff]
        %v515 = vld [vmem:[%s171 + $0x5a0] sm:$0xff]
        %v516 = vld [vmem:[%s171 + $0x5a8] sm:$0xff]
        %v517 = vld [vmem:[%s171 + $0x5b0] sm:$0xff]
        %v518 = vld [vmem:[%s171 + $0x5b8] sm:$0xff]
        %v519 = vld [vmem:[%s171 + $0x5c0] sm:$0xff]
        %v520 = vld [vmem:[%s171 + $0x5c8] sm:$0xff]
        %v521 = vld [vmem:[%s171 + $0x5d0] sm:$0xff]
        %v522 = vld [vmem:[%s171 + $0x5d8] sm:$0xff]
        %v523 = vld [vmem:[%s171 + $0x5e0] sm:$0xff]
        %v524 = vld [vmem:[%s171 + $0x5e8] sm:$0xff]
        %v525 = vld [vmem:[%s171 + $0x5f0] sm:$0xff]
        %v526 = vld [vmem:[%s171 + $0x5f8] sm:$0xff]
        %v527 = vld [vmem:[%s171 + $0x600] sm:$0xff]
        %v528 = vld [vmem:[%s171 + $0x608] sm:$0xff]
        %v529 = vld [vmem:[%s171 + $0x610] sm:$0xff]
        %v530 = vld [vmem:[%s171 + $0x618] sm:$0xff]
        %v531 = vld [vmem:[%s171 + $0x620] sm:$0xff]
        %v532 = vld [vmem:[%s171 + $0x628] sm:$0xff]
        %v533 = vld [vmem:[%s171 + $0x630] sm:$0xff]
        %v534 = vld [vmem:[%s171 + $0x638] sm:$0xff]
        %v535 = vld [vmem:[%s171 + $0x640] sm:$0xff]
        %v536 = vld [vmem:[%s171 + $0x648] sm:$0xff]
        %v537 = vld [vmem:[%s171 + $0x650] sm:$0xff]
        %v538 = vld [vmem:[%s171 + $0x658] sm:$0xff]
        %v539 = vld [vmem:[%s171 + $0x660] sm:$0xff]
        %v540 = vld [vmem:[%s171 + $0x668] sm:$0xff]
        %v541 = vld [vmem:[%s171 + $0x670] sm:$0xff]
        %v542 = vld [vmem:[%s171 + $0x678] sm:$0xff]
        %v543 = vld [vmem:[%s171 + $0x680] sm:$0xff]
        %v544 = vld [vmem:[%s171 + $0x688] sm:$0xff]
        %v545 = vld [vmem:[%s171 + $0x690] sm:$0xff]
        %v546 = vld [vmem:[%s171 + $0x698] sm:$0xff]
        %v547 = vld [vmem:[%s171 + $0x6a0] sm:$0xff]
        %v548 = vld [vmem:[%s171 + $0x6a8] sm:$0xff]
        %v549 = vld [vmem:[%s171 + $0x6b0] sm:$0xff]
        %v550 = vld [vmem:[%s171 + $0x6b8] sm:$0xff]
        %v551 = vld [vmem:[%s171 + $0x6c0] sm:$0xff]
        %v552 = vld [vmem:[%s171 + $0x6c8] sm:$0xff]
        %v553 = vld [vmem:[%s171 + $0x6d0] sm:$0xff]
        %v554 = vld [vmem:[%s171 + $0x6d8] sm:$0xff]
        %v555 = vld [vmem:[%s171 + $0x6e0] sm:$0xff]
        %v556 = vld [vmem:[%s171 + $0x6e8] sm:$0xff]
        %v557 = vld [vmem:[%s171 + $0x6f0] sm:$0xff]
        %v558 = vld [vmem:[%s171 + $0x6f8] sm:$0xff]
        %v559 = vld [vmem:[%s171 + $0x700] sm:$0xff]
        %v560 = vld [vmem:[%s171 + $0x708] sm:$0xff]
        %v561 = vld [vmem:[%s171 + $0x710] sm:$0xff]
        %v562 = vld [vmem:[%s171 + $0x718] sm:$0xff]
        %v563 = vld [vmem:[%s171 + $0x720] sm:$0xff]
        %v564 = vld [vmem:[%s171 + $0x728] sm:$0xff]
        %v565 = vld [vmem:[%s171 + $0x730] sm:$0xff]
        %v566 = vld [vmem:[%s171 + $0x738] sm:$0xff]
        %v567 = vld [vmem:[%s171 + $0x740] sm:$0xff]
        %v568 = vld [vmem:[%s171 + $0x748] sm:$0xff]
        %v569 = vld [vmem:[%s171 + $0x750] sm:$0xff]
        %v570 = vld [vmem:[%s171 + $0x758] sm:$0xff]
        %v571 = vld [vmem:[%s171 + $0x760] sm:$0xff]
        %v572 = vld [vmem:[%s171 + $0x768] sm:$0xff]
        %v573 = vld [vmem:[%s171 + $0x770] sm:$0xff]
        %v574 = vld [vmem:[%s171 + $0x778] sm:$0xff]
        %v575 = vld [vmem:[%s171 + $0x780] sm:$0xff]
        %v576 = vld [vmem:[%s171 + $0x788] sm:$0xff]
        %v577 = vld [vmem:[%s171 + $0x790] sm:$0xff]
        %v578 = vld [vmem:[%s171 + $0x798] sm:$0xff]
        %v579 = vld [vmem:[%s171 + $0x7a0] sm:$0xff]
        %v580 = vld [vmem:[%s171 + $0x7a8] sm:$0xff]
        %v581 = vld [vmem:[%s171 + $0x7b0] sm:$0xff]
        %v582 = vld [vmem:[%s171 + $0x7b8] sm:$0xff]
        %v583 = vld [vmem:[%s171 + $0x7c0] sm:$0xff]
        %v584 = vld [vmem:[%s171 + $0x7c8] sm:$0xff]
        %v585 = vld [vmem:[%s171 + $0x7d0] sm:$0xff]
        %v586 = vld [vmem:[%s171 + $0x7d8] sm:$0xff]
        %v587 = vld [vmem:[%s171 + $0x7e0] sm:$0xff]
        %v588 = vld [vmem:[%s171 + $0x7e8] sm:$0xff]
        %v589 = vld [vmem:[%s171 + $0x7f0] sm:$0xff]
        %v590 = vld [vmem:[%s171 + $0x7f8] sm:$0xff]
        %v719 = vunpack.c.l.b16 %v207
        %v720 = vunpack.c.h.b16 %v207
        %v721 = vunpack.c.l.b16 %v208
        %v722 = vunpack.c.h.b16 %v208
        %v723 = vunpack.c.l.b16 %v209
        %v724 = vunpack.c.h.b16 %v209
        %v725 = vunpack.c.l.b16 %v210
        %v726 = vunpack.c.h.b16 %v210
        %v727 = vunpack.c.l.b16 %v211
        %v728 = vunpack.c.h.b16 %v211
        %v729 = vunpack.c.l.b16 %v212
        %v730 = vunpack.c.h.b16 %v212
        %v731 = vunpack.c.l.b16 %v213
        %v732 = vunpack.c.h.b16 %v213
        %v733 = vunpack.c.l.b16 %v214
        %v734 = vunpack.c.h.b16 %v214
        %v735 = vunpack.c.l.b16 %v215
        %v736 = vunpack.c.h.b16 %v215
        %v737 = vunpack.c.l.b16 %v216
        %v738 = vunpack.c.h.b16 %v216
        %v739 = vunpack.c.l.b16 %v217
        %v740 = vunpack.c.h.b16 %v217
        %v741 = vunpack.c.l.b16 %v218
        %v742 = vunpack.c.h.b16 %v218
        %v743 = vunpack.c.l.b16 %v219
        %v744 = vunpack.c.h.b16 %v219
        %v745 = vunpack.c.l.b16 %v220
        %v746 = vunpack.c.h.b16 %v220
        %v747 = vunpack.c.l.b16 %v221
        %v748 = vunpack.c.h.b16 %v221
        %v749 = vunpack.c.l.b16 %v222
        %v750 = vunpack.c.h.b16 %v222
        %v751 = vunpack.c.l.b16 %v223
        %v752 = vunpack.c.h.b16 %v223
        %v753 = vunpack.c.l.b16 %v224
        %v754 = vunpack.c.h.b16 %v224
        %v755 = vunpack.c.l.b16 %v225
        %v756 = vunpack.c.h.b16 %v225
        %v757 = vunpack.c.l.b16 %v226
        %v758 = vunpack.c.h.b16 %v226
        %v759 = vunpack.c.l.b16 %v227
        %v760 = vunpack.c.h.b16 %v227
        %v761 = vunpack.c.l.b16 %v228
        %v762 = vunpack.c.h.b16 %v228
        %v763 = vunpack.c.l.b16 %v229
        %v764 = vunpack.c.h.b16 %v229
        %v765 = vunpack.c.l.b16 %v230
        %v766 = vunpack.c.h.b16 %v230
        %v767 = vunpack.c.l.b16 %v231
        %v768 = vunpack.c.h.b16 %v231
        %v769 = vunpack.c.l.b16 %v232
        %v770 = vunpack.c.h.b16 %v232
        %v771 = vunpack.c.l.b16 %v233
        %v772 = vunpack.c.h.b16 %v233
        %v773 = vunpack.c.l.b16 %v234
        %v774 = vunpack.c.h.b16 %v234
        %v775 = vunpack.c.l.b16 %v235
        %v776 = vunpack.c.h.b16 %v235
        %v777 = vunpack.c.l.b16 %v236
        %v778 = vunpack.c.h.b16 %v236
        %v779 = vunpack.c.l.b16 %v237
        %v780 = vunpack.c.h.b16 %v237
        %v781 = vunpack.c.l.b16 %v238
        %v782 = vunpack.c.h.b16 %v238
        %v783 = vunpack.c.l.b16 %v239
        %v784 = vunpack.c.h.b16 %v239
        %v785 = vunpack.c.l.b16 %v240
        %v786 = vunpack.c.h.b16 %v240
        %v787 = vunpack.c.l.b16 %v241
        %v788 = vunpack.c.h.b16 %v241
        %v789 = vunpack.c.l.b16 %v242
        %v790 = vunpack.c.h.b16 %v242
        %v791 = vunpack.c.l.b16 %v243
        %v792 = vunpack.c.h.b16 %v243
        %v793 = vunpack.c.l.b16 %v244
        %v794 = vunpack.c.h.b16 %v244
        %v795 = vunpack.c.l.b16 %v245
        %v796 = vunpack.c.h.b16 %v245
        %v797 = vunpack.c.l.b16 %v246
        %v798 = vunpack.c.h.b16 %v246
        %v799 = vunpack.c.l.b16 %v247
        %v800 = vunpack.c.h.b16 %v247
        %v801 = vunpack.c.l.b16 %v248
        %v802 = vunpack.c.h.b16 %v248
        %v803 = vunpack.c.l.b16 %v249
        %v804 = vunpack.c.h.b16 %v249
        %v805 = vunpack.c.l.b16 %v250
        %v806 = vunpack.c.h.b16 %v250
        %v807 = vunpack.c.l.b16 %v251
        %v808 = vunpack.c.h.b16 %v251
        %v809 = vunpack.c.l.b16 %v252
        %v810 = vunpack.c.h.b16 %v252
        %v811 = vunpack.c.l.b16 %v253
        %v812 = vunpack.c.h.b16 %v253
        %v813 = vunpack.c.l.b16 %v254
        %v814 = vunpack.c.h.b16 %v254
        %v815 = vunpack.c.l.b16 %v255
        %v816 = vunpack.c.h.b16 %v255
        %v817 = vunpack.c.l.b16 %v256
        %v818 = vunpack.c.h.b16 %v256
        %v819 = vunpack.c.l.b16 %v257
        %v820 = vunpack.c.h.b16 %v257
        %v821 = vunpack.c.l.b16 %v258
        %v822 = vunpack.c.h.b16 %v258
        %v823 = vunpack.c.l.b16 %v259
        %v824 = vunpack.c.h.b16 %v259
        %v825 = vunpack.c.l.b16 %v260
        %v826 = vunpack.c.h.b16 %v260
        %v827 = vunpack.c.l.b16 %v261
        %v828 = vunpack.c.h.b16 %v261
        %v829 = vunpack.c.l.b16 %v262
        %v830 = vunpack.c.h.b16 %v262
        %v831 = vunpack.c.l.b16 %v263
        %v832 = vunpack.c.h.b16 %v263
        %v833 = vunpack.c.l.b16 %v264
        %v834 = vunpack.c.h.b16 %v264
        %v835 = vunpack.c.l.b16 %v265
        %v836 = vunpack.c.h.b16 %v265
        %v837 = vunpack.c.l.b16 %v266
        %v838 = vunpack.c.h.b16 %v266
        %v839 = vunpack.c.l.b16 %v267
        %v840 = vunpack.c.h.b16 %v267
        %v841 = vunpack.c.l.b16 %v268
        %v842 = vunpack.c.h.b16 %v268
        %v843 = vunpack.c.l.b16 %v269
        %v844 = vunpack.c.h.b16 %v269
        %v845 = vunpack.c.l.b16 %v270
        %v846 = vunpack.c.h.b16 %v270
        %v847 = vunpack.c.l.b16 %v271
        %v848 = vunpack.c.h.b16 %v271
        %v849 = vunpack.c.l.b16 %v272
        %v850 = vunpack.c.h.b16 %v272
        %v851 = vunpack.c.l.b16 %v273
        %v852 = vunpack.c.h.b16 %v273
        %v853 = vunpack.c.l.b16 %v274
        %v854 = vunpack.c.h.b16 %v274
        %v855 = vunpack.c.l.b16 %v275
        %v856 = vunpack.c.h.b16 %v275
        %v857 = vunpack.c.l.b16 %v276
        %v858 = vunpack.c.h.b16 %v276
        %v859 = vunpack.c.l.b16 %v277
        %v860 = vunpack.c.h.b16 %v277
        %v861 = vunpack.c.l.b16 %v278
        %v862 = vunpack.c.h.b16 %v278
        %v863 = vunpack.c.l.b16 %v279
        %v864 = vunpack.c.h.b16 %v279
        %v865 = vunpack.c.l.b16 %v280
        %v866 = vunpack.c.h.b16 %v280
        %v867 = vunpack.c.l.b16 %v281
        %v868 = vunpack.c.h.b16 %v281
        %v869 = vunpack.c.l.b16 %v282
        %v870 = vunpack.c.h.b16 %v282
        %v871 = vunpack.c.l.b16 %v283
        %v872 = vunpack.c.h.b16 %v283
        %v873 = vunpack.c.l.b16 %v284
        %v874 = vunpack.c.h.b16 %v284
        %v875 = vunpack.c.l.b16 %v285
        %v876 = vunpack.c.h.b16 %v285
        %v877 = vunpack.c.l.b16 %v286
        %v878 = vunpack.c.h.b16 %v286
        %v879 = vunpack.c.l.b16 %v287
        %v880 = vunpack.c.h.b16 %v287
        %v881 = vunpack.c.l.b16 %v288
        %v882 = vunpack.c.h.b16 %v288
        %v883 = vunpack.c.l.b16 %v289
        %v884 = vunpack.c.h.b16 %v289
        %v885 = vunpack.c.l.b16 %v290
        %v886 = vunpack.c.h.b16 %v290
        %v887 = vunpack.c.l.b16 %v291
        %v888 = vunpack.c.h.b16 %v291
        %v889 = vunpack.c.l.b16 %v292
        %v890 = vunpack.c.h.b16 %v292
        %v891 = vunpack.c.l.b16 %v293
        %v892 = vunpack.c.h.b16 %v293
        %v893 = vunpack.c.l.b16 %v294
        %v894 = vunpack.c.h.b16 %v294
        %v895 = vunpack.c.l.b16 %v295
        %v896 = vunpack.c.h.b16 %v295
        %v897 = vunpack.c.l.b16 %v296
        %v898 = vunpack.c.h.b16 %v296
        %v899 = vunpack.c.l.b16 %v297
        %v900 = vunpack.c.h.b16 %v297
        %v901 = vunpack.c.l.b16 %v298
        %v902 = vunpack.c.h.b16 %v298
        %v903 = vunpack.c.l.b16 %v299
        %v904 = vunpack.c.h.b16 %v299
        %v905 = vunpack.c.l.b16 %v300
        %v906 = vunpack.c.h.b16 %v300
        %v907 = vunpack.c.l.b16 %v301
        %v908 = vunpack.c.h.b16 %v301
        %v909 = vunpack.c.l.b16 %v302
        %v910 = vunpack.c.h.b16 %v302
        %v911 = vunpack.c.l.b16 %v303
        %v912 = vunpack.c.h.b16 %v303
        %v913 = vunpack.c.l.b16 %v304
        %v914 = vunpack.c.h.b16 %v304
        %v915 = vunpack.c.l.b16 %v305
        %v916 = vunpack.c.h.b16 %v305
        %v917 = vunpack.c.l.b16 %v306
        %v918 = vunpack.c.h.b16 %v306
        %v919 = vunpack.c.l.b16 %v307
        %v920 = vunpack.c.h.b16 %v307
        %v921 = vunpack.c.l.b16 %v308
        %v922 = vunpack.c.h.b16 %v308
        %v923 = vunpack.c.l.b16 %v309
        %v924 = vunpack.c.h.b16 %v309
        %v925 = vunpack.c.l.b16 %v310
        %v926 = vunpack.c.h.b16 %v310
        %v927 = vunpack.c.l.b16 %v311
        %v928 = vunpack.c.h.b16 %v311
        %v929 = vunpack.c.l.b16 %v312
        %v930 = vunpack.c.h.b16 %v312
        %v931 = vunpack.c.l.b16 %v313
        %v932 = vunpack.c.h.b16 %v313
        %v933 = vunpack.c.l.b16 %v314
        %v934 = vunpack.c.h.b16 %v314
        %v935 = vunpack.c.l.b16 %v315
        %v936 = vunpack.c.h.b16 %v315
        %v937 = vunpack.c.l.b16 %v316
        %v938 = vunpack.c.h.b16 %v316
        %v939 = vunpack.c.l.b16 %v317
        %v940 = vunpack.c.h.b16 %v317
        %v941 = vunpack.c.l.b16 %v318
        %v942 = vunpack.c.h.b16 %v318
        %v943 = vunpack.c.l.b16 %v319
        %v944 = vunpack.c.h.b16 %v319
        %v945 = vunpack.c.l.b16 %v320
        %v946 = vunpack.c.h.b16 %v320
        %v947 = vunpack.c.l.b16 %v321
        %v948 = vunpack.c.h.b16 %v321
        %v949 = vunpack.c.l.b16 %v322
        %v950 = vunpack.c.h.b16 %v322
        %v951 = vunpack.c.l.b16 %v323
        %v952 = vunpack.c.h.b16 %v323
        %v953 = vunpack.c.l.b16 %v324
        %v954 = vunpack.c.h.b16 %v324
        %v955 = vunpack.c.l.b16 %v325
        %v956 = vunpack.c.h.b16 %v325
        %v957 = vunpack.c.l.b16 %v326
        %v958 = vunpack.c.h.b16 %v326
        %v959 = vunpack.c.l.b16 %v327
        %v960 = vunpack.c.h.b16 %v327
        %v961 = vunpack.c.l.b16 %v328
        %v962 = vunpack.c.h.b16 %v328
        %v963 = vunpack.c.l.b16 %v329
        %v964 = vunpack.c.h.b16 %v329
        %v965 = vunpack.c.l.b16 %v330
        %v966 = vunpack.c.h.b16 %v330
        %v967 = vunpack.c.l.b16 %v331
        %v968 = vunpack.c.h.b16 %v331
        %v969 = vunpack.c.l.b16 %v332
        %v970 = vunpack.c.h.b16 %v332
        %v971 = vunpack.c.l.b16 %v333
        %v972 = vunpack.c.h.b16 %v333
        %v973 = vunpack.c.l.b16 %v334
        %v974 = vunpack.c.h.b16 %v334
        %v975 = vpack.c.b16 %v735, %v719
        %v976 = vpack.c.b16 %v736, %v720
        %v977 = vpack.c.b16 %v737, %v721
        %v978 = vpack.c.b16 %v738, %v722
        %v979 = vpack.c.b16 %v739, %v723
        %v980 = vpack.c.b16 %v740, %v724
        %v981 = vpack.c.b16 %v741, %v725
        %v982 = vpack.c.b16 %v742, %v726
        %v983 = vpack.c.b16 %v743, %v727
        %v984 = vpack.c.b16 %v744, %v728
        %v985 = vpack.c.b16 %v745, %v729
        %v986 = vpack.c.b16 %v746, %v730
        %v987 = vpack.c.b16 %v747, %v731
        %v988 = vpack.c.b16 %v748, %v732
        %v989 = vpack.c.b16 %v749, %v733
        %v990 = vpack.c.b16 %v750, %v734
        %v991 = vpack.c.b16 %v767, %v751
        %v992 = vpack.c.b16 %v768, %v752
        %v993 = vpack.c.b16 %v769, %v753
        %v994 = vpack.c.b16 %v770, %v754
        %v995 = vpack.c.b16 %v771, %v755
        %v996 = vpack.c.b16 %v772, %v756
        %v997 = vpack.c.b16 %v773, %v757
        %v998 = vpack.c.b16 %v774, %v758
        %v999 = vpack.c.b16 %v775, %v759
        %v1000 = vpack.c.b16 %v776, %v760
        %v1001 = vpack.c.b16 %v777, %v761
        %v1002 = vpack.c.b16 %v778, %v762
        %v1003 = vpack.c.b16 %v779, %v763
        %v1004 = vpack.c.b16 %v780, %v764
        %v1005 = vpack.c.b16 %v781, %v765
        %v1006 = vpack.c.b16 %v782, %v766
        %v1007 = vpack.c.b16 %v799, %v783
        %v1008 = vpack.c.b16 %v800, %v784
        %v1009 = vpack.c.b16 %v801, %v785
        %v1010 = vpack.c.b16 %v802, %v786
        %v1011 = vpack.c.b16 %v803, %v787
        %v1012 = vpack.c.b16 %v804, %v788
        %v1013 = vpack.c.b16 %v805, %v789
        %v1014 = vpack.c.b16 %v806, %v790
        %v1015 = vpack.c.b16 %v807, %v791
        %v1016 = vpack.c.b16 %v808, %v792
        %v1017 = vpack.c.b16 %v809, %v793
        %v1018 = vpack.c.b16 %v810, %v794
        %v1019 = vpack.c.b16 %v811, %v795
        %v1020 = vpack.c.b16 %v812, %v796
        %v1021 = vpack.c.b16 %v813, %v797
        %v1022 = vpack.c.b16 %v814, %v798
        %v1023 = vpack.c.b16 %v831, %v815
        %v1024 = vpack.c.b16 %v832, %v816
        %v1025 = vpack.c.b16 %v833, %v817
        %v1026 = vpack.c.b16 %v834, %v818
        %v1027 = vpack.c.b16 %v835, %v819
        %v1028 = vpack.c.b16 %v836, %v820
        %v1029 = vpack.c.b16 %v837, %v821
        %v1030 = vpack.c.b16 %v838, %v822
        %v1031 = vpack.c.b16 %v839, %v823
        %v1032 = vpack.c.b16 %v840, %v824
        %v1033 = vpack.c.b16 %v841, %v825
        %v1034 = vpack.c.b16 %v842, %v826
        %v1035 = vpack.c.b16 %v843, %v827
        %v1036 = vpack.c.b16 %v844, %v828
        %v1037 = vpack.c.b16 %v845, %v829
        %v1038 = vpack.c.b16 %v846, %v830
        %v1039 = vpack.c.b16 %v863, %v847
        %v1040 = vpack.c.b16 %v864, %v848
        %v1041 = vpack.c.b16 %v865, %v849
        %v1042 = vpack.c.b16 %v866, %v850
        %v1043 = vpack.c.b16 %v867, %v851
        %v1044 = vpack.c.b16 %v868, %v852
        %v1045 = vpack.c.b16 %v869, %v853
        %v1046 = vpack.c.b16 %v870, %v854
        %v1047 = vpack.c.b16 %v871, %v855
        %v1048 = vpack.c.b16 %v872, %v856
        %v1049 = vpack.c.b16 %v873, %v857
        %v1050 = vpack.c.b16 %v874, %v858
        %v1051 = vpack.c.b16 %v875, %v859
        %v1052 = vpack.c.b16 %v876, %v860
        %v1053 = vpack.c.b16 %v877, %v861
        %v1054 = vpack.c.b16 %v878, %v862
        %v1055 = vpack.c.b16 %v895, %v879
        %v1056 = vpack.c.b16 %v896, %v880
        %v1057 = vpack.c.b16 %v897, %v881
        %v1058 = vpack.c.b16 %v898, %v882
        %v1059 = vpack.c.b16 %v899, %v883
        %v1060 = vpack.c.b16 %v900, %v884
        %v1061 = vpack.c.b16 %v901, %v885
        %v1062 = vpack.c.b16 %v902, %v886
        %v1063 = vpack.c.b16 %v903, %v887
        %v1064 = vpack.c.b16 %v904, %v888
        %v1065 = vpack.c.b16 %v905, %v889
        %v1066 = vpack.c.b16 %v906, %v890
        %v1067 = vpack.c.b16 %v907, %v891
        %v1068 = vpack.c.b16 %v908, %v892
        %v1069 = vpack.c.b16 %v909, %v893
        %v1070 = vpack.c.b16 %v910, %v894
        %v1071 = vpack.c.b16 %v927, %v911
        %v1072 = vpack.c.b16 %v928, %v912
        %v1073 = vpack.c.b16 %v929, %v913
        %v1074 = vpack.c.b16 %v930, %v914
        %v1075 = vpack.c.b16 %v931, %v915
        %v1076 = vpack.c.b16 %v932, %v916
        %v1077 = vpack.c.b16 %v933, %v917
        %v1078 = vpack.c.b16 %v934, %v918
        %v1079 = vpack.c.b16 %v935, %v919
        %v1080 = vpack.c.b16 %v936, %v920
        %v1081 = vpack.c.b16 %v937, %v921
        %v1082 = vpack.c.b16 %v938, %v922
        %v1083 = vpack.c.b16 %v939, %v923
        %v1084 = vpack.c.b16 %v940, %v924
        %v1085 = vpack.c.b16 %v941, %v925
        %v1086 = vpack.c.b16 %v942, %v926
        %v1087 = vpack.c.b16 %v959, %v943
        %v1088 = vpack.c.b16 %v960, %v944
        %v1089 = vpack.c.b16 %v961, %v945
        %v1090 = vpack.c.b16 %v962, %v946
        %v1091 = vpack.c.b16 %v963, %v947
        %v1092 = vpack.c.b16 %v964, %v948
        %v1093 = vpack.c.b16 %v965, %v949
        %v1094 = vpack.c.b16 %v966, %v950
        %v1095 = vpack.c.b16 %v967, %v951
        %v1096 = vpack.c.b16 %v968, %v952
        %v1097 = vpack.c.b16 %v969, %v953
        %v1098 = vpack.c.b16 %v970, %v954
        %v1099 = vpack.c.b16 %v971, %v955
        %v1100 = vpack.c.b16 %v972, %v956
        %v1101 = vpack.c.b16 %v973, %v957
        %v1102 = vpack.c.b16 %v974, %v958
        %v1487 = vunpack.c.l.b16 %v335
        %v1488 = vunpack.c.h.b16 %v335
        %v1489 = vunpack.c.l.b16 %v336
        %v1490 = vunpack.c.h.b16 %v336
        %v1491 = vunpack.c.l.b16 %v337
        %v1492 = vunpack.c.h.b16 %v337
        %v1493 = vunpack.c.l.b16 %v338
        %v1494 = vunpack.c.h.b16 %v338
        %v1495 = vunpack.c.l.b16 %v339
        %v1496 = vunpack.c.h.b16 %v339
        %v1497 = vunpack.c.l.b16 %v340
        %v1498 = vunpack.c.h.b16 %v340
        %v1499 = vunpack.c.l.b16 %v341
        %v1500 = vunpack.c.h.b16 %v341
        %v1501 = vunpack.c.l.b16 %v342
        %v1502 = vunpack.c.h.b16 %v342
        %v1503 = vunpack.c.l.b16 %v343
        %v1504 = vunpack.c.h.b16 %v343
        %v1505 = vunpack.c.l.b16 %v344
        %v1506 = vunpack.c.h.b16 %v344
        %v1507 = vunpack.c.l.b16 %v345
        %v1508 = vunpack.c.h.b16 %v345
        %v1509 = vunpack.c.l.b16 %v346
        %v1510 = vunpack.c.h.b16 %v346
        %v1511 = vunpack.c.l.b16 %v347
        %v1512 = vunpack.c.h.b16 %v347
        %v1513 = vunpack.c.l.b16 %v348
        %v1514 = vunpack.c.h.b16 %v348
        %v1515 = vunpack.c.l.b16 %v349
        %v1516 = vunpack.c.h.b16 %v349
        %v1517 = vunpack.c.l.b16 %v350
        %v1518 = vunpack.c.h.b16 %v350
        %v1519 = vunpack.c.l.b16 %v351
        %v1520 = vunpack.c.h.b16 %v351
        %v1521 = vunpack.c.l.b16 %v352
        %v1522 = vunpack.c.h.b16 %v352
        %v1523 = vunpack.c.l.b16 %v353
        %v1524 = vunpack.c.h.b16 %v353
        %v1525 = vunpack.c.l.b16 %v354
        %v1526 = vunpack.c.h.b16 %v354
        %v1527 = vunpack.c.l.b16 %v355
        %v1528 = vunpack.c.h.b16 %v355
        %v1529 = vunpack.c.l.b16 %v356
        %v1530 = vunpack.c.h.b16 %v356
        %v1531 = vunpack.c.l.b16 %v357
        %v1532 = vunpack.c.h.b16 %v357
        %v1533 = vunpack.c.l.b16 %v358
        %v1534 = vunpack.c.h.b16 %v358
        %v1535 = vunpack.c.l.b16 %v359
        %v1536 = vunpack.c.h.b16 %v359
        %v1537 = vunpack.c.l.b16 %v360
        %v1538 = vunpack.c.h.b16 %v360
        %v1539 = vunpack.c.l.b16 %v361
        %v1540 = vunpack.c.h.b16 %v361
        %v1541 = vunpack.c.l.b16 %v362
        %v1542 = vunpack.c.h.b16 %v362
        %v1543 = vunpack.c.l.b16 %v363
        %v1544 = vunpack.c.h.b16 %v363
        %v1545 = vunpack.c.l.b16 %v364
        %v1546 = vunpack.c.h.b16 %v364
        %v1547 = vunpack.c.l.b16 %v365
        %v1548 = vunpack.c.h.b16 %v365
        %v1549 = vunpack.c.l.b16 %v366
        %v1550 = vunpack.c.h.b16 %v366
        %v1551 = vunpack.c.l.b16 %v367
        %v1552 = vunpack.c.h.b16 %v367
        %v1553 = vunpack.c.l.b16 %v368
        %v1554 = vunpack.c.h.b16 %v368
        %v1555 = vunpack.c.l.b16 %v369
        %v1556 = vunpack.c.h.b16 %v369
        %v1557 = vunpack.c.l.b16 %v370
        %v1558 = vunpack.c.h.b16 %v370
        %v1559 = vunpack.c.l.b16 %v371
        %v1560 = vunpack.c.h.b16 %v371
        %v1561 = vunpack.c.l.b16 %v372
        %v1562 = vunpack.c.h.b16 %v372
        %v1563 = vunpack.c.l.b16 %v373
        %v1564 = vunpack.c.h.b16 %v373
        %v1565 = vunpack.c.l.b16 %v374
        %v1566 = vunpack.c.h.b16 %v374
        %v1567 = vunpack.c.l.b16 %v375
        %v1568 = vunpack.c.h.b16 %v375
        %v1569 = vunpack.c.l.b16 %v376
        %v1570 = vunpack.c.h.b16 %v376
        %v1571 = vunpack.c.l.b16 %v377
        %v1572 = vunpack.c.h.b16 %v377
        %v1573 = vunpack.c.l.b16 %v378
        %v1574 = vunpack.c.h.b16 %v378
        %v1575 = vunpack.c.l.b16 %v379
        %v1576 = vunpack.c.h.b16 %v379
        %v1577 = vunpack.c.l.b16 %v380
        %v1578 = vunpack.c.h.b16 %v380
        %v1579 = vunpack.c.l.b16 %v381
        %v1580 = vunpack.c.h.b16 %v381
        %v1581 = vunpack.c.l.b16 %v382
        %v1582 = vunpack.c.h.b16 %v382
        %v1583 = vunpack.c.l.b16 %v383
        %v1584 = vunpack.c.h.b16 %v383
        %v1585 = vunpack.c.l.b16 %v384
        %v1586 = vunpack.c.h.b16 %v384
        %v1587 = vunpack.c.l.b16 %v385
        %v1588 = vunpack.c.h.b16 %v385
        %v1589 = vunpack.c.l.b16 %v386
        %v1590 = vunpack.c.h.b16 %v386
        %v1591 = vunpack.c.l.b16 %v387
        %v1592 = vunpack.c.h.b16 %v387
        %v1593 = vunpack.c.l.b16 %v388
        %v1594 = vunpack.c.h.b16 %v388
        %v1595 = vunpack.c.l.b16 %v389
        %v1596 = vunpack.c.h.b16 %v389
        %v1597 = vunpack.c.l.b16 %v390
        %v1598 = vunpack.c.h.b16 %v390
        %v1599 = vunpack.c.l.b16 %v391
        %v1600 = vunpack.c.h.b16 %v391
        %v1601 = vunpack.c.l.b16 %v392
        %v1602 = vunpack.c.h.b16 %v392
        %v1603 = vunpack.c.l.b16 %v393
        %v1604 = vunpack.c.h.b16 %v393
        %v1605 = vunpack.c.l.b16 %v394
        %v1606 = vunpack.c.h.b16 %v394
        %v1607 = vunpack.c.l.b16 %v395
        %v1608 = vunpack.c.h.b16 %v395
        %v1609 = vunpack.c.l.b16 %v396
        %v1610 = vunpack.c.h.b16 %v396
        %v1611 = vunpack.c.l.b16 %v397
        %v1612 = vunpack.c.h.b16 %v397
        %v1613 = vunpack.c.l.b16 %v398
        %v1614 = vunpack.c.h.b16 %v398
        %v1615 = vunpack.c.l.b16 %v399
        %v1616 = vunpack.c.h.b16 %v399
        %v1617 = vunpack.c.l.b16 %v400
        %v1618 = vunpack.c.h.b16 %v400
        %v1619 = vunpack.c.l.b16 %v401
        %v1620 = vunpack.c.h.b16 %v401
        %v1621 = vunpack.c.l.b16 %v402
        %v1622 = vunpack.c.h.b16 %v402
        %v1623 = vunpack.c.l.b16 %v403
        %v1624 = vunpack.c.h.b16 %v403
        %v1625 = vunpack.c.l.b16 %v404
        %v1626 = vunpack.c.h.b16 %v404
        %v1627 = vunpack.c.l.b16 %v405
        %v1628 = vunpack.c.h.b16 %v405
        %v1629 = vunpack.c.l.b16 %v406
        %v1630 = vunpack.c.h.b16 %v406
        %v1631 = vunpack.c.l.b16 %v407
        %v1632 = vunpack.c.h.b16 %v407
        %v1633 = vunpack.c.l.b16 %v408
        %v1634 = vunpack.c.h.b16 %v408
        %v1635 = vunpack.c.l.b16 %v409
        %v1636 = vunpack.c.h.b16 %v409
        %v1637 = vunpack.c.l.b16 %v410
        %v1638 = vunpack.c.h.b16 %v410
        %v1639 = vunpack.c.l.b16 %v411
        %v1640 = vunpack.c.h.b16 %v411
        %v1641 = vunpack.c.l.b16 %v412
        %v1642 = vunpack.c.h.b16 %v412
        %v1643 = vunpack.c.l.b16 %v413
        %v1644 = vunpack.c.h.b16 %v413
        %v1645 = vunpack.c.l.b16 %v414
        %v1646 = vunpack.c.h.b16 %v414
        %v1647 = vunpack.c.l.b16 %v415
        %v1648 = vunpack.c.h.b16 %v415
        %v1649 = vunpack.c.l.b16 %v416
        %v1650 = vunpack.c.h.b16 %v416
        %v1651 = vunpack.c.l.b16 %v417
        %v1652 = vunpack.c.h.b16 %v417
        %v1653 = vunpack.c.l.b16 %v418
        %v1654 = vunpack.c.h.b16 %v418
        %v1655 = vunpack.c.l.b16 %v419
        %v1656 = vunpack.c.h.b16 %v419
        %v1657 = vunpack.c.l.b16 %v420
        %v1658 = vunpack.c.h.b16 %v420
        %v1659 = vunpack.c.l.b16 %v421
        %v1660 = vunpack.c.h.b16 %v421
        %v1661 = vunpack.c.l.b16 %v422
        %v1662 = vunpack.c.h.b16 %v422
        %v1663 = vunpack.c.l.b16 %v423
        %v1664 = vunpack.c.h.b16 %v423
        %v1665 = vunpack.c.l.b16 %v424
        %v1666 = vunpack.c.h.b16 %v424
        %v1667 = vunpack.c.l.b16 %v425
        %v1668 = vunpack.c.h.b16 %v425
        %v1669 = vunpack.c.l.b16 %v426
        %v1670 = vunpack.c.h.b16 %v426
        %v1671 = vunpack.c.l.b16 %v427
        %v1672 = vunpack.c.h.b16 %v427
        %v1673 = vunpack.c.l.b16 %v428
        %v1674 = vunpack.c.h.b16 %v428
        %v1675 = vunpack.c.l.b16 %v429
        %v1676 = vunpack.c.h.b16 %v429
        %v1677 = vunpack.c.l.b16 %v430
        %v1678 = vunpack.c.h.b16 %v430
        %v1679 = vunpack.c.l.b16 %v431
        %v1680 = vunpack.c.h.b16 %v431
        %v1681 = vunpack.c.l.b16 %v432
        %v1682 = vunpack.c.h.b16 %v432
        %v1683 = vunpack.c.l.b16 %v433
        %v1684 = vunpack.c.h.b16 %v433
        %v1685 = vunpack.c.l.b16 %v434
        %v1686 = vunpack.c.h.b16 %v434
        %v1687 = vunpack.c.l.b16 %v435
        %v1688 = vunpack.c.h.b16 %v435
        %v1689 = vunpack.c.l.b16 %v436
        %v1690 = vunpack.c.h.b16 %v436
        %v1691 = vunpack.c.l.b16 %v437
        %v1692 = vunpack.c.h.b16 %v437
        %v1693 = vunpack.c.l.b16 %v438
        %v1694 = vunpack.c.h.b16 %v438
        %v1695 = vunpack.c.l.b16 %v439
        %v1696 = vunpack.c.h.b16 %v439
        %v1697 = vunpack.c.l.b16 %v440
        %v1698 = vunpack.c.h.b16 %v440
        %v1699 = vunpack.c.l.b16 %v441
        %v1700 = vunpack.c.h.b16 %v441
        %v1701 = vunpack.c.l.b16 %v442
        %v1702 = vunpack.c.h.b16 %v442
        %v1703 = vunpack.c.l.b16 %v443
        %v1704 = vunpack.c.h.b16 %v443
        %v1705 = vunpack.c.l.b16 %v444
        %v1706 = vunpack.c.h.b16 %v444
        %v1707 = vunpack.c.l.b16 %v445
        %v1708 = vunpack.c.h.b16 %v445
        %v1709 = vunpack.c.l.b16 %v446
        %v1710 = vunpack.c.h.b16 %v446
        %v1711 = vunpack.c.l.b16 %v447
        %v1712 = vunpack.c.h.b16 %v447
        %v1713 = vunpack.c.l.b16 %v448
        %v1714 = vunpack.c.h.b16 %v448
        %v1715 = vunpack.c.l.b16 %v449
        %v1716 = vunpack.c.h.b16 %v449
        %v1717 = vunpack.c.l.b16 %v450
        %v1718 = vunpack.c.h.b16 %v450
        %v1719 = vunpack.c.l.b16 %v451
        %v1720 = vunpack.c.h.b16 %v451
        %v1721 = vunpack.c.l.b16 %v452
        %v1722 = vunpack.c.h.b16 %v452
        %v1723 = vunpack.c.l.b16 %v453
        %v1724 = vunpack.c.h.b16 %v453
        %v1725 = vunpack.c.l.b16 %v454
        %v1726 = vunpack.c.h.b16 %v454
        %v1727 = vunpack.c.l.b16 %v455
        %v1728 = vunpack.c.h.b16 %v455
        %v1729 = vunpack.c.l.b16 %v456
        %v1730 = vunpack.c.h.b16 %v456
        %v1731 = vunpack.c.l.b16 %v457
        %v1732 = vunpack.c.h.b16 %v457
        %v1733 = vunpack.c.l.b16 %v458
        %v1734 = vunpack.c.h.b16 %v458
        %v1735 = vunpack.c.l.b16 %v459
        %v1736 = vunpack.c.h.b16 %v459
        %v1737 = vunpack.c.l.b16 %v460
        %v1738 = vunpack.c.h.b16 %v460
        %v1739 = vunpack.c.l.b16 %v461
        %v1740 = vunpack.c.h.b16 %v461
        %v1741 = vunpack.c.l.b16 %v462
        %v1742 = vunpack.c.h.b16 %v462
        %v1743 = vunpack.c.l.b16 %v463
        %v1744 = vunpack.c.h.b16 %v463
        %v1745 = vunpack.c.l.b16 %v464
        %v1746 = vunpack.c.h.b16 %v464
        %v1747 = vunpack.c.l.b16 %v465
        %v1748 = vunpack.c.h.b16 %v465
        %v1749 = vunpack.c.l.b16 %v466
        %v1750 = vunpack.c.h.b16 %v466
        %v1751 = vunpack.c.l.b16 %v467
        %v1752 = vunpack.c.h.b16 %v467
        %v1753 = vunpack.c.l.b16 %v468
        %v1754 = vunpack.c.h.b16 %v468
        %v1755 = vunpack.c.l.b16 %v469
        %v1756 = vunpack.c.h.b16 %v469
        %v1757 = vunpack.c.l.b16 %v470
        %v1758 = vunpack.c.h.b16 %v470
        %v1759 = vunpack.c.l.b16 %v471
        %v1760 = vunpack.c.h.b16 %v471
        %v1761 = vunpack.c.l.b16 %v472
        %v1762 = vunpack.c.h.b16 %v472
        %v1763 = vunpack.c.l.b16 %v473
        %v1764 = vunpack.c.h.b16 %v473
        %v1765 = vunpack.c.l.b16 %v474
        %v1766 = vunpack.c.h.b16 %v474
        %v1767 = vunpack.c.l.b16 %v475
        %v1768 = vunpack.c.h.b16 %v475
        %v1769 = vunpack.c.l.b16 %v476
        %v1770 = vunpack.c.h.b16 %v476
        %v1771 = vunpack.c.l.b16 %v477
        %v1772 = vunpack.c.h.b16 %v477
        %v1773 = vunpack.c.l.b16 %v478
        %v1774 = vunpack.c.h.b16 %v478
        %v1775 = vunpack.c.l.b16 %v479
        %v1776 = vunpack.c.h.b16 %v479
        %v1777 = vunpack.c.l.b16 %v480
        %v1778 = vunpack.c.h.b16 %v480
        %v1779 = vunpack.c.l.b16 %v481
        %v1780 = vunpack.c.h.b16 %v481
        %v1781 = vunpack.c.l.b16 %v482
        %v1782 = vunpack.c.h.b16 %v482
        %v1783 = vunpack.c.l.b16 %v483
        %v1784 = vunpack.c.h.b16 %v483
        %v1785 = vunpack.c.l.b16 %v484
        %v1786 = vunpack.c.h.b16 %v484
        %v1787 = vunpack.c.l.b16 %v485
        %v1788 = vunpack.c.h.b16 %v485
        %v1789 = vunpack.c.l.b16 %v486
        %v1790 = vunpack.c.h.b16 %v486
        %v1791 = vunpack.c.l.b16 %v487
        %v1792 = vunpack.c.h.b16 %v487
        %v1793 = vunpack.c.l.b16 %v488
        %v1794 = vunpack.c.h.b16 %v488
        %v1795 = vunpack.c.l.b16 %v489
        %v1796 = vunpack.c.h.b16 %v489
        %v1797 = vunpack.c.l.b16 %v490
        %v1798 = vunpack.c.h.b16 %v490
        %v1799 = vunpack.c.l.b16 %v491
        %v1800 = vunpack.c.h.b16 %v491
        %v1801 = vunpack.c.l.b16 %v492
        %v1802 = vunpack.c.h.b16 %v492
        %v1803 = vunpack.c.l.b16 %v493
        %v1804 = vunpack.c.h.b16 %v493
        %v1805 = vunpack.c.l.b16 %v494
        %v1806 = vunpack.c.h.b16 %v494
        %v1807 = vunpack.c.l.b16 %v495
        %v1808 = vunpack.c.h.b16 %v495
        %v1809 = vunpack.c.l.b16 %v496
        %v1810 = vunpack.c.h.b16 %v496
        %v1811 = vunpack.c.l.b16 %v497
        %v1812 = vunpack.c.h.b16 %v497
        %v1813 = vunpack.c.l.b16 %v498
        %v1814 = vunpack.c.h.b16 %v498
        %v1815 = vunpack.c.l.b16 %v499
        %v1816 = vunpack.c.h.b16 %v499
        %v1817 = vunpack.c.l.b16 %v500
        %v1818 = vunpack.c.h.b16 %v500
        %v1819 = vunpack.c.l.b16 %v501
        %v1820 = vunpack.c.h.b16 %v501
        %v1821 = vunpack.c.l.b16 %v502
        %v1822 = vunpack.c.h.b16 %v502
        %v1823 = vunpack.c.l.b16 %v503
        %v1824 = vunpack.c.h.b16 %v503
        %v1825 = vunpack.c.l.b16 %v504
        %v1826 = vunpack.c.h.b16 %v504
        %v1827 = vunpack.c.l.b16 %v505
        %v1828 = vunpack.c.h.b16 %v505
        %v1829 = vunpack.c.l.b16 %v506
        %v1830 = vunpack.c.h.b16 %v506
        %v1831 = vunpack.c.l.b16 %v507
        %v1832 = vunpack.c.h.b16 %v507
        %v1833 = vunpack.c.l.b16 %v508
        %v1834 = vunpack.c.h.b16 %v508
        %v1835 = vunpack.c.l.b16 %v509
        %v1836 = vunpack.c.h.b16 %v509
        %v1837 = vunpack.c.l.b16 %v510
        %v1838 = vunpack.c.h.b16 %v510
        %v1839 = vunpack.c.l.b16 %v511
        %v1840 = vunpack.c.h.b16 %v511
        %v1841 = vunpack.c.l.b16 %v512
        %v1842 = vunpack.c.h.b16 %v512
        %v1843 = vunpack.c.l.b16 %v513
        %v1844 = vunpack.c.h.b16 %v513
        %v1845 = vunpack.c.l.b16 %v514
        %v1846 = vunpack.c.h.b16 %v514
        %v1847 = vunpack.c.l.b16 %v515
        %v1848 = vunpack.c.h.b16 %v515
        %v1849 = vunpack.c.l.b16 %v516
        %v1850 = vunpack.c.h.b16 %v516
        %v1851 = vunpack.c.l.b16 %v517
        %v1852 = vunpack.c.h.b16 %v517
        %v1853 = vunpack.c.l.b16 %v518
        %v1854 = vunpack.c.h.b16 %v518
        %v1855 = vunpack.c.l.b16 %v519
        %v1856 = vunpack.c.h.b16 %v519
        %v1857 = vunpack.c.l.b16 %v520
        %v1858 = vunpack.c.h.b16 %v520
        %v1859 = vunpack.c.l.b16 %v521
        %v1860 = vunpack.c.h.b16 %v521
        %v1861 = vunpack.c.l.b16 %v522
        %v1862 = vunpack.c.h.b16 %v522
        %v1863 = vunpack.c.l.b16 %v523
        %v1864 = vunpack.c.h.b16 %v523
        %v1865 = vunpack.c.l.b16 %v524
        %v1866 = vunpack.c.h.b16 %v524
        %v1867 = vunpack.c.l.b16 %v525
        %v1868 = vunpack.c.h.b16 %v525
        %v1869 = vunpack.c.l.b16 %v526
        %v1870 = vunpack.c.h.b16 %v526
        %v1871 = vunpack.c.l.b16 %v527
        %v1872 = vunpack.c.h.b16 %v527
        %v1873 = vunpack.c.l.b16 %v528
        %v1874 = vunpack.c.h.b16 %v528
        %v1875 = vunpack.c.l.b16 %v529
        %v1876 = vunpack.c.h.b16 %v529
        %v1877 = vunpack.c.l.b16 %v530
        %v1878 = vunpack.c.h.b16 %v530
        %v1879 = vunpack.c.l.b16 %v531
        %v1880 = vunpack.c.h.b16 %v531
        %v1881 = vunpack.c.l.b16 %v532
        %v1882 = vunpack.c.h.b16 %v532
        %v1883 = vunpack.c.l.b16 %v533
        %v1884 = vunpack.c.h.b16 %v533
        %v1885 = vunpack.c.l.b16 %v534
        %v1886 = vunpack.c.h.b16 %v534
        %v1887 = vunpack.c.l.b16 %v535
        %v1888 = vunpack.c.h.b16 %v535
        %v1889 = vunpack.c.l.b16 %v536
        %v1890 = vunpack.c.h.b16 %v536
        %v1891 = vunpack.c.l.b16 %v537
        %v1892 = vunpack.c.h.b16 %v537
        %v1893 = vunpack.c.l.b16 %v538
        %v1894 = vunpack.c.h.b16 %v538
        %v1895 = vunpack.c.l.b16 %v539
        %v1896 = vunpack.c.h.b16 %v539
        %v1897 = vunpack.c.l.b16 %v540
        %v1898 = vunpack.c.h.b16 %v540
        %v1899 = vunpack.c.l.b16 %v541
        %v1900 = vunpack.c.h.b16 %v541
        %v1901 = vunpack.c.l.b16 %v542
        %v1902 = vunpack.c.h.b16 %v542
        %v1903 = vunpack.c.l.b16 %v543
        %v1904 = vunpack.c.h.b16 %v543
        %v1905 = vunpack.c.l.b16 %v544
        %v1906 = vunpack.c.h.b16 %v544
        %v1907 = vunpack.c.l.b16 %v545
        %v1908 = vunpack.c.h.b16 %v545
        %v1909 = vunpack.c.l.b16 %v546
        %v1910 = vunpack.c.h.b16 %v546
        %v1911 = vunpack.c.l.b16 %v547
        %v1912 = vunpack.c.h.b16 %v547
        %v1913 = vunpack.c.l.b16 %v548
        %v1914 = vunpack.c.h.b16 %v548
        %v1915 = vunpack.c.l.b16 %v549
        %v1916 = vunpack.c.h.b16 %v549
        %v1917 = vunpack.c.l.b16 %v550
        %v1918 = vunpack.c.h.b16 %v550
        %v1919 = vunpack.c.l.b16 %v551
        %v1920 = vunpack.c.h.b16 %v551
        %v1921 = vunpack.c.l.b16 %v552
        %v1922 = vunpack.c.h.b16 %v552
        %v1923 = vunpack.c.l.b16 %v553
        %v1924 = vunpack.c.h.b16 %v553
        %v1925 = vunpack.c.l.b16 %v554
        %v1926 = vunpack.c.h.b16 %v554
        %v1927 = vunpack.c.l.b16 %v555
        %v1928 = vunpack.c.h.b16 %v555
        %v1929 = vunpack.c.l.b16 %v556
        %v1930 = vunpack.c.h.b16 %v556
        %v1931 = vunpack.c.l.b16 %v557
        %v1932 = vunpack.c.h.b16 %v557
        %v1933 = vunpack.c.l.b16 %v558
        %v1934 = vunpack.c.h.b16 %v558
        %v1935 = vunpack.c.l.b16 %v559
        %v1936 = vunpack.c.h.b16 %v559
        %v1937 = vunpack.c.l.b16 %v560
        %v1938 = vunpack.c.h.b16 %v560
        %v1939 = vunpack.c.l.b16 %v561
        %v1940 = vunpack.c.h.b16 %v561
        %v1941 = vunpack.c.l.b16 %v562
        %v1942 = vunpack.c.h.b16 %v562
        %v1943 = vunpack.c.l.b16 %v563
        %v1944 = vunpack.c.h.b16 %v563
        %v1945 = vunpack.c.l.b16 %v564
        %v1946 = vunpack.c.h.b16 %v564
        %v1947 = vunpack.c.l.b16 %v565
        %v1948 = vunpack.c.h.b16 %v565
        %v1949 = vunpack.c.l.b16 %v566
        %v1950 = vunpack.c.h.b16 %v566
        %v1951 = vunpack.c.l.b16 %v567
        %v1952 = vunpack.c.h.b16 %v567
        %v1953 = vunpack.c.l.b16 %v568
        %v1954 = vunpack.c.h.b16 %v568
        %v1955 = vunpack.c.l.b16 %v569
        %v1956 = vunpack.c.h.b16 %v569
        %v1957 = vunpack.c.l.b16 %v570
        %v1958 = vunpack.c.h.b16 %v570
        %v1959 = vunpack.c.l.b16 %v571
        %v1960 = vunpack.c.h.b16 %v571
        %v1961 = vunpack.c.l.b16 %v572
        %v1962 = vunpack.c.h.b16 %v572
        %v1963 = vunpack.c.l.b16 %v573
        %v1964 = vunpack.c.h.b16 %v573
        %v1965 = vunpack.c.l.b16 %v574
        %v1966 = vunpack.c.h.b16 %v574
        %v1967 = vunpack.c.l.b16 %v575
        %v1968 = vunpack.c.h.b16 %v575
        %v1969 = vunpack.c.l.b16 %v576
        %v1970 = vunpack.c.h.b16 %v576
        %v1971 = vunpack.c.l.b16 %v577
        %v1972 = vunpack.c.h.b16 %v577
        %v1973 = vunpack.c.l.b16 %v578
        %v1974 = vunpack.c.h.b16 %v578
        %v1975 = vunpack.c.l.b16 %v579
        %v1976 = vunpack.c.h.b16 %v579
        %v1977 = vunpack.c.l.b16 %v580
        %v1978 = vunpack.c.h.b16 %v580
        %v1979 = vunpack.c.l.b16 %v581
        %v1980 = vunpack.c.h.b16 %v581
        %v1981 = vunpack.c.l.b16 %v582
        %v1982 = vunpack.c.h.b16 %v582
        %v1983 = vunpack.c.l.b16 %v583
        %v1984 = vunpack.c.h.b16 %v583
        %v1985 = vunpack.c.l.b16 %v584
        %v1986 = vunpack.c.h.b16 %v584
        %v1987 = vunpack.c.l.b16 %v585
        %v1988 = vunpack.c.h.b16 %v585
        %v1989 = vunpack.c.l.b16 %v586
        %v1990 = vunpack.c.h.b16 %v586
        %v1991 = vunpack.c.l.b16 %v587
        %v1992 = vunpack.c.h.b16 %v587
        %v1993 = vunpack.c.l.b16 %v588
        %v1994 = vunpack.c.h.b16 %v588
        %v1995 = vunpack.c.l.b16 %v589
        %v1996 = vunpack.c.h.b16 %v589
        %v1997 = vunpack.c.l.b16 %v590
        %v1998 = vunpack.c.h.b16 %v590
        %v1999 = vpack.c.b16 %v1489, %v1487
        %v2000 = vpack.c.b16 %v1490, %v1488
        %v2001 = vpack.c.b16 %v1493, %v1491
        %v2002 = vpack.c.b16 %v1494, %v1492
        %v2003 = vpack.c.b16 %v1497, %v1495
        %v2004 = vpack.c.b16 %v1498, %v1496
        %v2005 = vpack.c.b16 %v1501, %v1499
        %v2006 = vpack.c.b16 %v1502, %v1500
        %v2007 = vpack.c.b16 %v1505, %v1503
        %v2008 = vpack.c.b16 %v1506, %v1504
        %v2009 = vpack.c.b16 %v1509, %v1507
        %v2010 = vpack.c.b16 %v1510, %v1508
        %v2011 = vpack.c.b16 %v1513, %v1511
        %v2012 = vpack.c.b16 %v1514, %v1512
        %v2013 = vpack.c.b16 %v1517, %v1515
        %v2014 = vpack.c.b16 %v1518, %v1516
        %v2015 = vpack.c.b16 %v1521, %v1519
        %v2016 = vpack.c.b16 %v1522, %v1520
        %v2017 = vpack.c.b16 %v1525, %v1523
        %v2018 = vpack.c.b16 %v1526, %v1524
        %v2019 = vpack.c.b16 %v1529, %v1527
        %v2020 = vpack.c.b16 %v1530, %v1528
        %v2021 = vpack.c.b16 %v1533, %v1531
        %v2022 = vpack.c.b16 %v1534, %v1532
        %v2023 = vpack.c.b16 %v1537, %v1535
        %v2024 = vpack.c.b16 %v1538, %v1536
        %v2025 = vpack.c.b16 %v1541, %v1539
        %v2026 = vpack.c.b16 %v1542, %v1540
        %v2027 = vpack.c.b16 %v1545, %v1543
        %v2028 = vpack.c.b16 %v1546, %v1544
        %v2029 = vpack.c.b16 %v1549, %v1547
        %v2030 = vpack.c.b16 %v1550, %v1548
        %v2031 = vpack.c.b16 %v1553, %v1551
        %v2032 = vpack.c.b16 %v1554, %v1552
        %v2033 = vpack.c.b16 %v1557, %v1555
        %v2034 = vpack.c.b16 %v1558, %v1556
        %v2035 = vpack.c.b16 %v1561, %v1559
        %v2036 = vpack.c.b16 %v1562, %v1560
        %v2037 = vpack.c.b16 %v1565, %v1563
        %v2038 = vpack.c.b16 %v1566, %v1564
        %v2039 = vpack.c.b16 %v1569, %v1567
        %v2040 = vpack.c.b16 %v1570, %v1568
        %v2041 = vpack.c.b16 %v1573, %v1571
        %v2042 = vpack.c.b16 %v1574, %v1572
        %v2043 = vpack.c.b16 %v1577, %v1575
        %v2044 = vpack.c.b16 %v1578, %v1576
        %v2045 = vpack.c.b16 %v1581, %v1579
        %v2046 = vpack.c.b16 %v1582, %v1580
        %v2047 = vpack.c.b16 %v1585, %v1583
        %v2048 = vpack.c.b16 %v1586, %v1584
        %v2049 = vpack.c.b16 %v1589, %v1587
        %v2050 = vpack.c.b16 %v1590, %v1588
        %v2051 = vpack.c.b16 %v1593, %v1591
        %v2052 = vpack.c.b16 %v1594, %v1592
        %v2053 = vpack.c.b16 %v1597, %v1595
        %v2054 = vpack.c.b16 %v1598, %v1596
        %v2055 = vpack.c.b16 %v1601, %v1599
        %v2056 = vpack.c.b16 %v1602, %v1600
        %v2057 = vpack.c.b16 %v1605, %v1603
        %v2058 = vpack.c.b16 %v1606, %v1604
        %v2059 = vpack.c.b16 %v1609, %v1607
        %v2060 = vpack.c.b16 %v1610, %v1608
        %v2061 = vpack.c.b16 %v1613, %v1611
        %v2062 = vpack.c.b16 %v1614, %v1612
        %v2063 = vpack.c.b16 %v1617, %v1615
        %v2064 = vpack.c.b16 %v1618, %v1616
        %v2065 = vpack.c.b16 %v1621, %v1619
        %v2066 = vpack.c.b16 %v1622, %v1620
        %v2067 = vpack.c.b16 %v1625, %v1623
        %v2068 = vpack.c.b16 %v1626, %v1624
        %v2069 = vpack.c.b16 %v1629, %v1627
        %v2070 = vpack.c.b16 %v1630, %v1628
        %v2071 = vpack.c.b16 %v1633, %v1631
        %v2072 = vpack.c.b16 %v1634, %v1632
        %v2073 = vpack.c.b16 %v1637, %v1635
        %v2074 = vpack.c.b16 %v1638, %v1636
        %v2075 = vpack.c.b16 %v1641, %v1639
        %v2076 = vpack.c.b16 %v1642, %v1640
        %v2077 = vpack.c.b16 %v1645, %v1643
        %v2078 = vpack.c.b16 %v1646, %v1644
        %v2079 = vpack.c.b16 %v1649, %v1647
        %v2080 = vpack.c.b16 %v1650, %v1648
        %v2081 = vpack.c.b16 %v1653, %v1651
        %v2082 = vpack.c.b16 %v1654, %v1652
        %v2083 = vpack.c.b16 %v1657, %v1655
        %v2084 = vpack.c.b16 %v1658, %v1656
        %v2085 = vpack.c.b16 %v1661, %v1659
        %v2086 = vpack.c.b16 %v1662, %v1660
        %v2087 = vpack.c.b16 %v1665, %v1663
        %v2088 = vpack.c.b16 %v1666, %v1664
        %v2089 = vpack.c.b16 %v1669, %v1667
        %v2090 = vpack.c.b16 %v1670, %v1668
        %v2091 = vpack.c.b16 %v1673, %v1671
        %v2092 = vpack.c.b16 %v1674, %v1672
        %v2093 = vpack.c.b16 %v1677, %v1675
        %v2094 = vpack.c.b16 %v1678, %v1676
        %v2095 = vpack.c.b16 %v1681, %v1679
        %v2096 = vpack.c.b16 %v1682, %v1680
        %v2097 = vpack.c.b16 %v1685, %v1683
        %v2098 = vpack.c.b16 %v1686, %v1684
        %v2099 = vpack.c.b16 %v1689, %v1687
        %v2100 = vpack.c.b16 %v1690, %v1688
        %v2101 = vpack.c.b16 %v1693, %v1691
        %v2102 = vpack.c.b16 %v1694, %v1692
        %v2103 = vpack.c.b16 %v1697, %v1695
        %v2104 = vpack.c.b16 %v1698, %v1696
        %v2105 = vpack.c.b16 %v1701, %v1699
        %v2106 = vpack.c.b16 %v1702, %v1700
        %v2107 = vpack.c.b16 %v1705, %v1703
        %v2108 = vpack.c.b16 %v1706, %v1704
        %v2109 = vpack.c.b16 %v1709, %v1707
        %v2110 = vpack.c.b16 %v1710, %v1708
        %v2111 = vpack.c.b16 %v1713, %v1711
        %v2112 = vpack.c.b16 %v1714, %v1712
        %v2113 = vpack.c.b16 %v1717, %v1715
        %v2114 = vpack.c.b16 %v1718, %v1716
        %v2115 = vpack.c.b16 %v1721, %v1719
        %v2116 = vpack.c.b16 %v1722, %v1720
        %v2117 = vpack.c.b16 %v1725, %v1723
        %v2118 = vpack.c.b16 %v1726, %v1724
        %v2119 = vpack.c.b16 %v1729, %v1727
        %v2120 = vpack.c.b16 %v1730, %v1728
        %v2121 = vpack.c.b16 %v1733, %v1731
        %v2122 = vpack.c.b16 %v1734, %v1732
        %v2123 = vpack.c.b16 %v1737, %v1735
        %v2124 = vpack.c.b16 %v1738, %v1736
        %v2125 = vpack.c.b16 %v1741, %v1739
        %v2126 = vpack.c.b16 %v1742, %v1740
        %v2127 = vpack.c.b16 %v1745, %v1743
        %v2128 = vpack.c.b16 %v1746, %v1744
        %v2129 = vpack.c.b16 %v1749, %v1747
        %v2130 = vpack.c.b16 %v1750, %v1748
        %v2131 = vpack.c.b16 %v1753, %v1751
        %v2132 = vpack.c.b16 %v1754, %v1752
        %v2133 = vpack.c.b16 %v1757, %v1755
        %v2134 = vpack.c.b16 %v1758, %v1756
        %v2135 = vpack.c.b16 %v1761, %v1759
        %v2136 = vpack.c.b16 %v1762, %v1760
        %v2137 = vpack.c.b16 %v1765, %v1763
        %v2138 = vpack.c.b16 %v1766, %v1764
        %v2139 = vpack.c.b16 %v1769, %v1767
        %v2140 = vpack.c.b16 %v1770, %v1768
        %v2141 = vpack.c.b16 %v1773, %v1771
        %v2142 = vpack.c.b16 %v1774, %v1772
        %v2143 = vpack.c.b16 %v1777, %v1775
        %v2144 = vpack.c.b16 %v1778, %v1776
        %v2145 = vpack.c.b16 %v1781, %v1779
        %v2146 = vpack.c.b16 %v1782, %v1780
        %v2147 = vpack.c.b16 %v1785, %v1783
        %v2148 = vpack.c.b16 %v1786, %v1784
        %v2149 = vpack.c.b16 %v1789, %v1787
        %v2150 = vpack.c.b16 %v1790, %v1788
        %v2151 = vpack.c.b16 %v1793, %v1791
        %v2152 = vpack.c.b16 %v1794, %v1792
        %v2153 = vpack.c.b16 %v1797, %v1795
        %v2154 = vpack.c.b16 %v1798, %v1796
        %v2155 = vpack.c.b16 %v1801, %v1799
        %v2156 = vpack.c.b16 %v1802, %v1800
        %v2157 = vpack.c.b16 %v1805, %v1803
        %v2158 = vpack.c.b16 %v1806, %v1804
        %v2159 = vpack.c.b16 %v1809, %v1807
        %v2160 = vpack.c.b16 %v1810, %v1808
        %v2161 = vpack.c.b16 %v1813, %v1811
        %v2162 = vpack.c.b16 %v1814, %v1812
        %v2163 = vpack.c.b16 %v1817, %v1815
        %v2164 = vpack.c.b16 %v1818, %v1816
        %v2165 = vpack.c.b16 %v1821, %v1819
        %v2166 = vpack.c.b16 %v1822, %v1820
        %v2167 = vpack.c.b16 %v1825, %v1823
        %v2168 = vpack.c.b16 %v1826, %v1824
        %v2169 = vpack.c.b16 %v1829, %v1827
        %v2170 = vpack.c.b16 %v1830, %v1828
        %v2171 = vpack.c.b16 %v1833, %v1831
        %v2172 = vpack.c.b16 %v1834, %v1832
        %v2173 = vpack.c.b16 %v1837, %v1835
        %v2174 = vpack.c.b16 %v1838, %v1836
        %v2175 = vpack.c.b16 %v1841, %v1839
        %v2176 = vpack.c.b16 %v1842, %v1840
        %v2177 = vpack.c.b16 %v1845, %v1843
        %v2178 = vpack.c.b16 %v1846, %v1844
        %v2179 = vpack.c.b16 %v1849, %v1847
        %v2180 = vpack.c.b16 %v1850, %v1848
        %v2181 = vpack.c.b16 %v1853, %v1851
        %v2182 = vpack.c.b16 %v1854, %v1852
        %v2183 = vpack.c.b16 %v1857, %v1855
        %v2184 = vpack.c.b16 %v1858, %v1856
        %v2185 = vpack.c.b16 %v1861, %v1859
        %v2186 = vpack.c.b16 %v1862, %v1860
        %v2187 = vpack.c.b16 %v1865, %v1863
        %v2188 = vpack.c.b16 %v1866, %v1864
        %v2189 = vpack.c.b16 %v1869, %v1867
        %v2190 = vpack.c.b16 %v1870, %v1868
        %v2191 = vpack.c.b16 %v1873, %v1871
        %v2192 = vpack.c.b16 %v1874, %v1872
        %v2193 = vpack.c.b16 %v1877, %v1875
        %v2194 = vpack.c.b16 %v1878, %v1876
        %v2195 = vpack.c.b16 %v1881, %v1879
        %v2196 = vpack.c.b16 %v1882, %v1880
        %v2197 = vpack.c.b16 %v1885, %v1883
        %v2198 = vpack.c.b16 %v1886, %v1884
        %v2199 = vpack.c.b16 %v1889, %v1887
        %v2200 = vpack.c.b16 %v1890, %v1888
        %v2201 = vpack.c.b16 %v1893, %v1891
        %v2202 = vpack.c.b16 %v1894, %v1892
        %v2203 = vpack.c.b16 %v1897, %v1895
        %v2204 = vpack.c.b16 %v1898, %v1896
        %v2205 = vpack.c.b16 %v1901, %v1899
        %v2206 = vpack.c.b16 %v1902, %v1900
        %v2207 = vpack.c.b16 %v1905, %v1903
        %v2208 = vpack.c.b16 %v1906, %v1904
        %v2209 = vpack.c.b16 %v1909, %v1907
        %v2210 = vpack.c.b16 %v1910, %v1908
        %v2211 = vpack.c.b16 %v1913, %v1911
        %v2212 = vpack.c.b16 %v1914, %v1912
        %v2213 = vpack.c.b16 %v1917, %v1915
        %v2214 = vpack.c.b16 %v1918, %v1916
        %v2215 = vpack.c.b16 %v1921, %v1919
        %v2216 = vpack.c.b16 %v1922, %v1920
        %v2217 = vpack.c.b16 %v1925, %v1923
        %v2218 = vpack.c.b16 %v1926, %v1924
        %v2219 = vpack.c.b16 %v1929, %v1927
        %v2220 = vpack.c.b16 %v1930, %v1928
        %v2221 = vpack.c.b16 %v1933, %v1931
        %v2222 = vpack.c.b16 %v1934, %v1932
        %v2223 = vpack.c.b16 %v1937, %v1935
        %v2224 = vpack.c.b16 %v1938, %v1936
        %v2225 = vpack.c.b16 %v1941, %v1939
        %v2226 = vpack.c.b16 %v1942, %v1940
        %v2227 = vpack.c.b16 %v1945, %v1943
        %v2228 = vpack.c.b16 %v1946, %v1944
        %v2229 = vpack.c.b16 %v1949, %v1947
        %v2230 = vpack.c.b16 %v1950, %v1948
        %v2231 = vpack.c.b16 %v1953, %v1951
        %v2232 = vpack.c.b16 %v1954, %v1952
        %v2233 = vpack.c.b16 %v1957, %v1955
        %v2234 = vpack.c.b16 %v1958, %v1956
        %v2235 = vpack.c.b16 %v1961, %v1959
        %v2236 = vpack.c.b16 %v1962, %v1960
        %v2237 = vpack.c.b16 %v1965, %v1963
        %v2238 = vpack.c.b16 %v1966, %v1964
        %v2239 = vpack.c.b16 %v1969, %v1967
        %v2240 = vpack.c.b16 %v1970, %v1968
        %v2241 = vpack.c.b16 %v1973, %v1971
        %v2242 = vpack.c.b16 %v1974, %v1972
        %v2243 = vpack.c.b16 %v1977, %v1975
        %v2244 = vpack.c.b16 %v1978, %v1976
        %v2245 = vpack.c.b16 %v1981, %v1979
        %v2246 = vpack.c.b16 %v1982, %v1980
        %v2247 = vpack.c.b16 %v1985, %v1983
        %v2248 = vpack.c.b16 %v1986, %v1984
        %v2249 = vpack.c.b16 %v1989, %v1987
        %v2250 = vpack.c.b16 %v1990, %v1988
        %v2251 = vpack.c.b16 %v1993, %v1991
        %v2252 = vpack.c.b16 %v1994, %v1992
        %v2253 = vpack.c.b16 %v1997, %v1995
        %v2254 = vpack.c.b16 %v1998, %v1996
        %2511 = vmatprep.subr.bf16.mxu0 %v2000
        %2512 = vmatpush1.bf16.msra.mxu0 %v1999
        %2513 = vmatprep.subr.bf16.mxu0 %v2002
        %2514 = vmatpush1.bf16.msra.mxu0 %v2001
        %2515 = vmatprep.subr.bf16.mxu0 %v2004
        %2516 = vmatpush1.bf16.msra.mxu0 %v2003
        %2517 = vmatprep.subr.bf16.mxu0 %v2006
        %2518 = vmatpush1.bf16.msra.mxu0 %v2005
        %2519 = vmatprep.subr.bf16.mxu0 %v2008
        %2520 = vmatpush1.bf16.msra.mxu0 %v2007
        %2521 = vmatprep.subr.bf16.mxu0 %v2010
        %2522 = vmatpush1.bf16.msra.mxu0 %v2009
        %2523 = vmatprep.subr.bf16.mxu0 %v2012
        %2524 = vmatpush1.bf16.msra.mxu0 %v2011
        %2525 = vmatprep.subr.bf16.mxu0 %v2014
        %2526 = vmatpush1.bf16.msra.mxu0 %v2013
        %2527 = vmatprep.subr.bf16.mxu0 %v2016
        %2528 = vmatpush1.bf16.msra.mxu0 %v2015
        %2529 = vmatprep.subr.bf16.mxu0 %v2018
        %2530 = vmatpush1.bf16.msra.mxu0 %v2017
        %2531 = vmatprep.subr.bf16.mxu0 %v2020
        %2532 = vmatpush1.bf16.msra.mxu0 %v2019
        %2533 = vmatprep.subr.bf16.mxu0 %v2022
        %2534 = vmatpush1.bf16.msra.mxu0 %v2021
        %2535 = vmatprep.subr.bf16.mxu0 %v2024
        %2536 = vmatpush1.bf16.msra.mxu0 %v2023
        %2537 = vmatprep.subr.bf16.mxu0 %v2026
        %2538 = vmatpush1.bf16.msra.mxu0 %v2025
        %2539 = vmatprep.subr.bf16.mxu0 %v2028
        %2540 = vmatpush1.bf16.msra.mxu0 %v2027
        %2541 = vmatprep.subr.bf16.mxu0 %v2030
        %2542 = vmatpush1.bf16.msra.mxu0 %v2029
        %2543 = vmatprep.mubr.bf16.mxu0 %v976
        %2544 = vmatmul.mubr.bf16.gmra.mrb[0].mxu0 %v975
        %v2545 = vpop.f32.mrb[0].mxu0
        %v2546 = vadd.f32 0.0, %v2545
        %v2547 = vpop.f32.mrb[0].mxu0
        %v2548 = vadd.f32 0.0, %v2547
        %v2549 = vpop.f32.mrb[0].mxu0
        %v2550 = vadd.f32 0.0, %v2549
        %v2551 = vpop.f32.mrb[0].mxu0
        %v2552 = vadd.f32 0.0, %v2551
        %2553 = vmatprep.mubr.bf16.mxu0 %v992
        %2554 = vmatmul.mubr.bf16.gmra.mrb[0].mxu0 %v991
        %v2555 = vpop.f32.mrb[0].mxu0
        %v2556 = vadd.f32 0.0, %v2555
        %v2557 = vpop.f32.mrb[0].mxu0
        %v2558 = vadd.f32 0.0, %v2557
        %v2559 = vpop.f32.mrb[0].mxu0
        %v2560 = vadd.f32 0.0, %v2559
        %v2561 = vpop.f32.mrb[0].mxu0
        %v2562 = vadd.f32 0.0, %v2561
        %2563 = vmatprep.mubr.bf16.mxu0 %v1008
        %2564 = vmatmul.mubr.bf16.gmra.mrb[0].mxu0 %v1007
        %v2565 = vpop.f32.mrb[0].mxu0
        %v2566 = vadd.f32 0.0, %v2565
        %v2567 = vpop.f32.mrb[0].mxu0
        %v2568 = vadd.f32 0.0, %v2567
        %v2569 = vpop.f32.mrb[0].mxu0
        %v2570 = vadd.f32 0.0, %v2569
        %v2571 = vpop.f32.mrb[0].mxu0
        %v2572 = vadd.f32 0.0, %v2571
        %2573 = vmatprep.mubr.bf16.mxu0 %v1024
        %2574 = vmatmul.mubr.bf16.gmra.mrb[0].mxu0 %v1023
        %v2575 = vpop.f32.mrb[0].mxu0
        %v2576 = vadd.f32 0.0, %v2575
        %v2577 = vpop.f32.mrb[0].mxu0
        %v2578 = vadd.f32 0.0, %v2577
        %v2579 = vpop.f32.mrb[0].mxu0
        %v2580 = vadd.f32 0.0, %v2579
        %v2581 = vpop.f32.mrb[0].mxu0
        %v2582 = vadd.f32 0.0, %v2581
        %2583 = vmatprep.mubr.bf16.mxu0 %v1040
        %2584 = vmatmul.mubr.bf16.gmra.mrb[0].mxu0 %v1039
        %v2585 = vpop.f32.mrb[0].mxu0
        %v2586 = vadd.f32 0.0, %v2585
        %v2587 = vpop.f32.mrb[0].mxu0
        %v2588 = vadd.f32 0.0, %v2587
        %v2589 = vpop.f32.mrb[0].mxu0
        %v2590 = vadd.f32 0.0, %v2589
        %v2591 = vpop.f32.mrb[0].mxu0
        %v2592 = vadd.f32 0.0, %v2591
        %2593 = vmatprep.mubr.bf16.mxu0 %v1056
        %2594 = vmatmul.mubr.bf16.gmra.mrb[0].mxu0 %v1055
        %v2595 = vpop.f32.mrb[0].mxu0
        %v2596 = vadd.f32 0.0, %v2595
        %v2597 = vpop.f32.mrb[0].mxu0
        %v2598 = vadd.f32 0.0, %v2597
        %v2599 = vpop.f32.mrb[0].mxu0
        %v2600 = vadd.f32 0.0, %v2599
        %v2601 = vpop.f32.mrb[0].mxu0
        %v2602 = vadd.f32 0.0, %v2601
        %2603 = vmatprep.mubr.bf16.mxu0 %v1072
        %2604 = vmatmul.mubr.bf16.gmra.mrb[0].mxu0 %v1071
        %v2605 = vpop.f32.mrb[0].mxu0
        %v2606 = vadd.f32 0.0, %v2605
        %v2607 = vpop.f32.mrb[0].mxu0
        %v2608 = vadd.f32 0.0, %v2607
        %v2609 = vpop.f32.mrb[0].mxu0
        %v2610 = vadd.f32 0.0, %v2609
        %v2611 = vpop.f32.mrb[0].mxu0
        %v2612 = vadd.f32 0.0, %v2611
        %2613 = vmatprep.mubr.bf16.mxu0 %v1088
        %2614 = vmatmul.mubr.bf16.gmra.mrb[0].mxu0 %v1087
        %v2615 = vpop.f32.mrb[0].mxu0
        %v2616 = vadd.f32 0.0, %v2615
        %v2617 = vpop.f32.mrb[0].mxu0
        %v2618 = vadd.f32 0.0, %v2617
        %v2619 = vpop.f32.mrb[0].mxu0
        %v2620 = vadd.f32 0.0, %v2619
        %v2621 = vpop.f32.mrb[0].mxu0
        %v2622 = vadd.f32 0.0, %v2621
        %2623 = vdwg.mxu0
        %2624 = vmatprep.subr.bf16.mxu0 %v2032
        %2625 = vmatpush1.bf16.msra.mxu0 %v2031
        %2626 = vmatprep.subr.bf16.mxu0 %v2034
        %2627 = vmatpush1.bf16.msra.mxu0 %v2033
        %2628 = vmatprep.subr.bf16.mxu0 %v2036
        %2629 = vmatpush1.bf16.msra.mxu0 %v2035
        %2630 = vmatprep.subr.bf16.mxu0 %v2038
        %2631 = vmatpush1.bf16.msra.mxu0 %v2037
        %2632 = vmatprep.subr.bf16.mxu0 %v2040
        %2633 = vmatpush1.bf16.msra.mxu0 %v2039
        %2634 = vmatprep.subr.bf16.mxu0 %v2042
        %2635 = vmatpush1.bf16.msra.mxu0 %v2041
        %2636 = vmatprep.subr.bf16.mxu0 %v2044
        %2637 = vmatpush1.bf16.msra.mxu0 %v2043
        %2638 = vmatprep.subr.bf16.mxu0 %v2046
        %2639 = vmatpush1.bf16.msra.mxu0 %v2045
        %2640 = vmatprep.subr.bf16.mxu0 %v2048
        %2641 = vmatpush1.bf16.msra.mxu0 %v2047
        %2642 = vmatprep.subr.bf16.mxu0 %v2050
        %2643 = vmatpush1.bf16.msra.mxu0 %v2049
        %2644 = vmatprep.subr.bf16.mxu0 %v2052
        %2645 = vmatpush1.bf16.msra.mxu0 %v2051
        %2646 = vmatprep.subr.bf16.mxu0 %v2054
        %2647 = vmatpush1.bf16.msra.mxu0 %v2053
        %2648 = vmatprep.subr.bf16.mxu0 %v2056
        %2649 = vmatpush1.bf16.msra.mxu0 %v2055
        %2650 = vmatprep.subr.bf16.mxu0 %v2058
        %2651 = vmatpush1.bf16.msra.mxu0 %v2057
        %2652 = vmatprep.subr.bf16.mxu0 %v2060
        %2653 = vmatpush1.bf16.msra.mxu0 %v2059
        %2654 = vmatprep.subr.bf16.mxu0 %v2062
        %2655 = vmatpush1.bf16.msra.mxu0 %v2061
        %2656 = vmatprep.mubr.bf16.mxu0 %v978
        %2657 = vmatmul.mubr.bf16.gmra.mrb[0].mxu0 %v977
        %v2658 = vpop.f32.mrb[0].mxu0
        %v2659 = vadd.f32 %v2546, %v2658
        %v2660 = vpop.f32.mrb[0].mxu0
        %v2661 = vadd.f32 %v2548, %v2660
        %v2662 = vpop.f32.mrb[0].mxu0
        %v2663 = vadd.f32 %v2550, %v2662
        %v2664 = vpop.f32.mrb[0].mxu0
        %v2665 = vadd.f32 %v2552, %v2664
        %2666 = vmatprep.mubr.bf16.mxu0 %v994
        %2667 = vmatmul.mubr.bf16.gmra.mrb[0].mxu0 %v993
        %v2668 = vpop.f32.mrb[0].mxu0
        %v2669 = vadd.f32 %v2556, %v2668
        %v2670 = vpop.f32.mrb[0].mxu0
        %v2671 = vadd.f32 %v2558, %v2670
        %v2672 = vpop.f32.mrb[0].mxu0
        %v2673 = vadd.f32 %v2560, %v2672
        %v2674 = vpop.f32.mrb[0].mxu0
        %v2675 = vadd.f32 %v2562, %v2674
        %2676 = vmatprep.mubr.bf16.mxu0 %v1010
        %2677 = vmatmul.mubr.bf16.gmra.mrb[0].mxu0 %v1009
        %v2678 = vpop.f32.mrb[0].mxu0
        %v2679 = vadd.f32 %v2566, %v2678
        %v2680 = vpop.f32.mrb[0].mxu0
        %v2681 = vadd.f32 %v2568, %v2680
        %v2682 = vpop.f32.mrb[0].mxu0
        %v2683 = vadd.f32 %v2570, %v2682
        %v2684 = vpop.f32.mrb[0].mxu0
        %v2685 = vadd.f32 %v2572, %v2684
        %2686 = vmatprep.mubr.bf16.mxu0 %v1026
        %2687 = vmatmul.mubr.bf16.gmra.mrb[0].mxu0 %v1025
        %v2688 = vpop.f32.mrb[0].mxu0
        %v2689 = vadd.f32 %v2576, %v2688
        %v2690 = vpop.f32.mrb[0].mxu0
        %v2691 = vadd.f32 %v2578, %v2690
        %v2692 = vpop.f32.mrb[0].mxu0
        %v2693 = vadd.f32 %v2580, %v2692
        %v2694 = vpop.f32.mrb[0].mxu0
        %v2695 = vadd.f32 %v2582, %v2694
        %2696 = vmatprep.mubr.bf16.mxu0 %v1042
        %2697 = vmatmul.mubr.bf16.gmra.mrb[0].mxu0 %v1041
        %v2698 = vpop.f32.mrb[0].mxu0
        %v2699 = vadd.f32 %v2586, %v2698
        %v2700 = vpop.f32.mrb[0].mxu0
        %v2701 = vadd.f32 %v2588, %v2700
        %v2702 = vpop.f32.mrb[0].mxu0
        %v2703 = vadd.f32 %v2590, %v2702
        %v2704 = vpop.f32.mrb[0].mxu0
        %v2705 = vadd.f32 %v2592, %v2704
        %2706 = vmatprep.mubr.bf16.mxu0 %v1058
        %2707 = vmatmul.mubr.bf16.gmra.mrb[0].mxu0 %v1057
        %v2708 = vpop.f32.mrb[0].mxu0
        %v2709 = vadd.f32 %v2596, %v2708
        %v2710 = vpop.f32.mrb[0].mxu0
        %v2711 = vadd.f32 %v2598, %v2710
        %v2712 = vpop.f32.mrb[0].mxu0
        %v2713 = vadd.f32 %v2600, %v2712
        %v2714 = vpop.f32.mrb[0].mxu0
        %v2715 = vadd.f32 %v2602, %v2714
        %2716 = vmatprep.mubr.bf16.mxu0 %v1074
        %2717 = vmatmul.mubr.bf16.gmra.mrb[0].mxu0 %v1073
        %v2718 = vpop.f32.mrb[0].mxu0
        %v2719 = vadd.f32 %v2606, %v2718
        %v2720 = vpop.f32.mrb[0].mxu0
        %v2721 = vadd.f32 %v2608, %v2720
        %v2722 = vpop.f32.mrb[0].mxu0
        %v2723 = vadd.f32 %v2610, %v2722
        %v2724 = vpop.f32.mrb[0].mxu0
        %v2725 = vadd.f32 %v2612, %v2724
        %2726 = vmatprep.mubr.bf16.mxu0 %v1090
        %2727 = vmatmul.mubr.bf16.gmra.mrb[0].mxu0 %v1089
        %v2728 = vpop.f32.mrb[0].mxu0
        %v2729 = vadd.f32 %v2616, %v2728
        %v2730 = vpop.f32.mrb[0].mxu0
        %v2731 = vadd.f32 %v2618, %v2730
        %v2732 = vpop.f32.mrb[0].mxu0
        %v2733 = vadd.f32 %v2620, %v2732
        %v2734 = vpop.f32.mrb[0].mxu0
        %v2735 = vadd.f32 %v2622, %v2734
        %2736 = vdwg.mxu0
        %2737 = vmatprep.subr.bf16.mxu0 %v2064
        %2738 = vmatpush1.bf16.msra.mxu0 %v2063
        %2739 = vmatprep.subr.bf16.mxu0 %v2066
        %2740 = vmatpush1.bf16.msra.mxu0 %v2065
        %2741 = vmatprep.subr.bf16.mxu0 %v2068
        %2742 = vmatpush1.bf16.msra.mxu0 %v2067
        %2743 = vmatprep.subr.bf16.mxu0 %v2070
        %2744 = vmatpush1.bf16.msra.mxu0 %v2069
        %2745 = vmatprep.subr.bf16.mxu0 %v2072
        %2746 = vmatpush1.bf16.msra.mxu0 %v2071
        %2747 = vmatprep.subr.bf16.mxu0 %v2074
        %2748 = vmatpush1.bf16.msra.mxu0 %v2073
        %2749 = vmatprep.subr.bf16.mxu0 %v2076
        %2750 = vmatpush1.bf16.msra.mxu0 %v2075
        %2751 = vmatprep.subr.bf16.mxu0 %v2078
        %2752 = vmatpush1.bf16.msra.mxu0 %v2077
        %2753 = vmatprep.subr.bf16.mxu0 %v2080
        %2754 = vmatpush1.bf16.msra.mxu0 %v2079
        %2755 = vmatprep.subr.bf16.mxu0 %v2082
        %2756 = vmatpush1.bf16.msra.mxu0 %v2081
        %2757 = vmatprep.subr.bf16.mxu0 %v2084
        %2758 = vmatpush1.bf16.msra.mxu0 %v2083
        %2759 = vmatprep.subr.bf16.mxu0 %v2086
        %2760 = vmatpush1.bf16.msra.mxu0 %v2085
        %2761 = vmatprep.subr.bf16.mxu0 %v2088
        %2762 = vmatpush1.bf16.msra.mxu0 %v2087
        %2763 = vmatprep.subr.bf16.mxu0 %v2090
        %2764 = vmatpush1.bf16.msra.mxu0 %v2089
        %2765 = vmatprep.subr.bf16.mxu0 %v2092
        %2766 = vmatpush1.bf16.msra.mxu0 %v2091
        %2767 = vmatprep.subr.bf16.mxu0 %v2094
        %2768 = vmatpush1.bf16.msra.mxu0 %v2093
        %2769 = vmatprep.mubr.bf16.mxu0 %v980
        %2770 = vmatmul.mubr.bf16.gmra.mrb[0].mxu0 %v979
        %v2771 = vpop.f32.mrb[0].mxu0
        %v2772 = vadd.f32 %v2659, %v2771
        %v2773 = vpop.f32.mrb[0].mxu0
        %v2774 = vadd.f32 %v2661, %v2773
        %v2775 = vpop.f32.mrb[0].mxu0
        %v2776 = vadd.f32 %v2663, %v2775
        %v2777 = vpop.f32.mrb[0].mxu0
        %v2778 = vadd.f32 %v2665, %v2777
        %2779 = vmatprep.mubr.bf16.mxu0 %v996
        %2780 = vmatmul.mubr.bf16.gmra.mrb[0].mxu0 %v995
        %v2781 = vpop.f32.mrb[0].mxu0
        %v2782 = vadd.f32 %v2669, %v2781
        %v2783 = vpop.f32.mrb[0].mxu0
        %v2784 = vadd.f32 %v2671, %v2783
        %v2785 = vpop.f32.mrb[0].mxu0
        %v2786 = vadd.f32 %v2673, %v2785
        %v2787 = vpop.f32.mrb[0].mxu0
        %v2788 = vadd.f32 %v2675, %v2787
        %2789 = vmatprep.mubr.bf16.mxu0 %v1012
        %2790 = vmatmul.mubr.bf16.gmra.mrb[0].mxu0 %v1011
        %v2791 = vpop.f32.mrb[0].mxu0
        %v2792 = vadd.f32 %v2679, %v2791
        %v2793 = vpop.f32.mrb[0].mxu0
        %v2794 = vadd.f32 %v2681, %v2793
        %v2795 = vpop.f32.mrb[0].mxu0
        %v2796 = vadd.f32 %v2683, %v2795
        %v2797 = vpop.f32.mrb[0].mxu0
        %v2798 = vadd.f32 %v2685, %v2797
        %2799 = vmatprep.mubr.bf16.mxu0 %v1028
        %2800 = vmatmul.mubr.bf16.gmra.mrb[0].mxu0 %v1027
        %v2801 = vpop.f32.mrb[0].mxu0
        %v2802 = vadd.f32 %v2689, %v2801
        %v2803 = vpop.f32.mrb[0].mxu0
        %v2804 = vadd.f32 %v2691, %v2803
        %v2805 = vpop.f32.mrb[0].mxu0
        %v2806 = vadd.f32 %v2693, %v2805
        %v2807 = vpop.f32.mrb[0].mxu0
        %v2808 = vadd.f32 %v2695, %v2807
        %2809 = vmatprep.mubr.bf16.mxu0 %v1044
        %2810 = vmatmul.mubr.bf16.gmra.mrb[0].mxu0 %v1043
        %v2811 = vpop.f32.mrb[0].mxu0
        %v2812 = vadd.f32 %v2699, %v2811
        %v2813 = vpop.f32.mrb[0].mxu0
        %v2814 = vadd.f32 %v2701, %v2813
        %v2815 = vpop.f32.mrb[0].mxu0
        %v2816 = vadd.f32 %v2703, %v2815
        %v2817 = vpop.f32.mrb[0].mxu0
        %v2818 = vadd.f32 %v2705, %v2817
        %2819 = vmatprep.mubr.bf16.mxu0 %v1060
        %2820 = vmatmul.mubr.bf16.gmra.mrb[0].mxu0 %v1059
        %v2821 = vpop.f32.mrb[0].mxu0
        %v2822 = vadd.f32 %v2709, %v2821
        %v2823 = vpop.f32.mrb[0].mxu0
        %v2824 = vadd.f32 %v2711, %v2823
        %v2825 = vpop.f32.mrb[0].mxu0
        %v2826 = vadd.f32 %v2713, %v2825
        %v2827 = vpop.f32.mrb[0].mxu0
        %v2828 = vadd.f32 %v2715, %v2827
        %2829 = vmatprep.mubr.bf16.mxu0 %v1076
        %2830 = vmatmul.mubr.bf16.gmra.mrb[0].mxu0 %v1075
        %v2831 = vpop.f32.mrb[0].mxu0
        %v2832 = vadd.f32 %v2719, %v2831
        %v2833 = vpop.f32.mrb[0].mxu0
        %v2834 = vadd.f32 %v2721, %v2833
        %v2835 = vpop.f32.mrb[0].mxu0
        %v2836 = vadd.f32 %v2723, %v2835
        %v2837 = vpop.f32.mrb[0].mxu0
        %v2838 = vadd.f32 %v2725, %v2837
        %2839 = vmatprep.mubr.bf16.mxu0 %v1092
        %2840 = vmatmul.mubr.bf16.gmra.mrb[0].mxu0 %v1091
        %v2841 = vpop.f32.mrb[0].mxu0
        %v2842 = vadd.f32 %v2729, %v2841
        %v2843 = vpop.f32.mrb[0].mxu0
        %v2844 = vadd.f32 %v2731, %v2843
        %v2845 = vpop.f32.mrb[0].mxu0
        %v2846 = vadd.f32 %v2733, %v2845
        %v2847 = vpop.f32.mrb[0].mxu0
        %v2848 = vadd.f32 %v2735, %v2847
        %2849 = vdwg.mxu0
        %2850 = vmatprep.subr.bf16.mxu0 %v2096
        %2851 = vmatpush1.bf16.msra.mxu0 %v2095
        %2852 = vmatprep.subr.bf16.mxu0 %v2098
        %2853 = vmatpush1.bf16.msra.mxu0 %v2097
        %2854 = vmatprep.subr.bf16.mxu0 %v2100
        %2855 = vmatpush1.bf16.msra.mxu0 %v2099
        %2856 = vmatprep.subr.bf16.mxu0 %v2102
        %2857 = vmatpush1.bf16.msra.mxu0 %v2101
        %2858 = vmatprep.subr.bf16.mxu0 %v2104
        %2859 = vmatpush1.bf16.msra.mxu0 %v2103
        %2860 = vmatprep.subr.bf16.mxu0 %v2106
        %2861 = vmatpush1.bf16.msra.mxu0 %v2105
        %2862 = vmatprep.subr.bf16.mxu0 %v2108
        %2863 = vmatpush1.bf16.msra.mxu0 %v2107
        %2864 = vmatprep.subr.bf16.mxu0 %v2110
        %2865 = vmatpush1.bf16.msra.mxu0 %v2109
        %2866 = vmatprep.subr.bf16.mxu0 %v2112
        %2867 = vmatpush1.bf16.msra.mxu0 %v2111
        %2868 = vmatprep.subr.bf16.mxu0 %v2114
        %2869 = vmatpush1.bf16.msra.mxu0 %v2113
        %2870 = vmatprep.subr.bf16.mxu0 %v2116
        %2871 = vmatpush1.bf16.msra.mxu0 %v2115
        %2872 = vmatprep.subr.bf16.mxu0 %v2118
        %2873 = vmatpush1.bf16.msra.mxu0 %v2117
        %2874 = vmatprep.subr.bf16.mxu0 %v2120
        %2875 = vmatpush1.bf16.msra.mxu0 %v2119
        %2876 = vmatprep.subr.bf16.mxu0 %v2122
        %2877 = vmatpush1.bf16.msra.mxu0 %v2121
        %2878 = vmatprep.subr.bf16.mxu0 %v2124
        %2879 = vmatpush1.bf16.msra.mxu0 %v2123
        %2880 = vmatprep.subr.bf16.mxu0 %v2126
        %2881 = vmatpush1.bf16.msra.mxu0 %v2125
        %2882 = vmatprep.mubr.bf16.mxu0 %v982
        %2883 = vmatmul.mubr.bf16.gmra.mrb[0].mxu0 %v981
        %v2884 = vpop.f32.mrb[0].mxu0
        %v2885 = vadd.f32 %v2772, %v2884
        %v2886 = vpop.f32.mrb[0].mxu0
        %v2887 = vadd.f32 %v2774, %v2886
        %v2888 = vpop.f32.mrb[0].mxu0
        %v2889 = vadd.f32 %v2776, %v2888
        %v2890 = vpop.f32.mrb[0].mxu0
        %v2891 = vadd.f32 %v2778, %v2890
        %2892 = vmatprep.mubr.bf16.mxu0 %v998
        %2893 = vmatmul.mubr.bf16.gmra.mrb[0].mxu0 %v997
        %v2894 = vpop.f32.mrb[0].mxu0
        %v2895 = vadd.f32 %v2782, %v2894
        %v2896 = vpop.f32.mrb[0].mxu0
        %v2897 = vadd.f32 %v2784, %v2896
        %v2898 = vpop.f32.mrb[0].mxu0
        %v2899 = vadd.f32 %v2786, %v2898
        %v2900 = vpop.f32.mrb[0].mxu0
        %v2901 = vadd.f32 %v2788, %v2900
        %2902 = vmatprep.mubr.bf16.mxu0 %v1014
        %2903 = vmatmul.mubr.bf16.gmra.mrb[0].mxu0 %v1013
        %v2904 = vpop.f32.mrb[0].mxu0
        %v2905 = vadd.f32 %v2792, %v2904
        %v2906 = vpop.f32.mrb[0].mxu0
        %v2907 = vadd.f32 %v2794, %v2906
        %v2908 = vpop.f32.mrb[0].mxu0
        %v2909 = vadd.f32 %v2796, %v2908
        %v2910 = vpop.f32.mrb[0].mxu0
        %v2911 = vadd.f32 %v2798, %v2910
        %2912 = vmatprep.mubr.bf16.mxu0 %v1030
        %2913 = vmatmul.mubr.bf16.gmra.mrb[0].mxu0 %v1029
        %v2914 = vpop.f32.mrb[0].mxu0
        %v2915 = vadd.f32 %v2802, %v2914
        %v2916 = vpop.f32.mrb[0].mxu0
        %v2917 = vadd.f32 %v2804, %v2916
        %v2918 = vpop.f32.mrb[0].mxu0
        %v2919 = vadd.f32 %v2806, %v2918
        %v2920 = vpop.f32.mrb[0].mxu0
        %v2921 = vadd.f32 %v2808, %v2920
        %2922 = vmatprep.mubr.bf16.mxu0 %v1046
        %2923 = vmatmul.mubr.bf16.gmra.mrb[0].mxu0 %v1045
        %v2924 = vpop.f32.mrb[0].mxu0
        %v2925 = vadd.f32 %v2812, %v2924
        %v2926 = vpop.f32.mrb[0].mxu0
        %v2927 = vadd.f32 %v2814, %v2926
        %v2928 = vpop.f32.mrb[0].mxu0
        %v2929 = vadd.f32 %v2816, %v2928
        %v2930 = vpop.f32.mrb[0].mxu0
        %v2931 = vadd.f32 %v2818, %v2930
        %2932 = vmatprep.mubr.bf16.mxu0 %v1062
        %2933 = vmatmul.mubr.bf16.gmra.mrb[0].mxu0 %v1061
        %v2934 = vpop.f32.mrb[0].mxu0
        %v2935 = vadd.f32 %v2822, %v2934
        %v2936 = vpop.f32.mrb[0].mxu0
        %v2937 = vadd.f32 %v2824, %v2936
        %v2938 = vpop.f32.mrb[0].mxu0
        %v2939 = vadd.f32 %v2826, %v2938
        %v2940 = vpop.f32.mrb[0].mxu0
        %v2941 = vadd.f32 %v2828, %v2940
        %2942 = vmatprep.mubr.bf16.mxu0 %v1078
        %2943 = vmatmul.mubr.bf16.gmra.mrb[0].mxu0 %v1077
        %v2944 = vpop.f32.mrb[0].mxu0
        %v2945 = vadd.f32 %v2832, %v2944
        %v2946 = vpop.f32.mrb[0].mxu0
        %v2947 = vadd.f32 %v2834, %v2946
        %v2948 = vpop.f32.mrb[0].mxu0
        %v2949 = vadd.f32 %v2836, %v2948
        %v2950 = vpop.f32.mrb[0].mxu0
        %v2951 = vadd.f32 %v2838, %v2950
        %2952 = vmatprep.mubr.bf16.mxu0 %v1094
        %2953 = vmatmul.mubr.bf16.gmra.mrb[0].mxu0 %v1093
        %v2954 = vpop.f32.mrb[0].mxu0
        %v2955 = vadd.f32 %v2842, %v2954
        %v2956 = vpop.f32.mrb[0].mxu0
        %v2957 = vadd.f32 %v2844, %v2956
        %v2958 = vpop.f32.mrb[0].mxu0
        %v2959 = vadd.f32 %v2846, %v2958
        %v2960 = vpop.f32.mrb[0].mxu0
        %v2961 = vadd.f32 %v2848, %v2960
        %2962 = vdwg.mxu0
        %2963 = vmatprep.subr.bf16.mxu0 %v2128
        %2964 = vmatpush1.bf16.msra.mxu0 %v2127
        %2965 = vmatprep.subr.bf16.mxu0 %v2130
        %2966 = vmatpush1.bf16.msra.mxu0 %v2129
        %2967 = vmatprep.subr.bf16.mxu0 %v2132
        %2968 = vmatpush1.bf16.msra.mxu0 %v2131
        %2969 = vmatprep.subr.bf16.mxu0 %v2134
        %2970 = vmatpush1.bf16.msra.mxu0 %v2133
        %2971 = vmatprep.subr.bf16.mxu0 %v2136
        %2972 = vmatpush1.bf16.msra.mxu0 %v2135
        %2973 = vmatprep.subr.bf16.mxu0 %v2138
        %2974 = vmatpush1.bf16.msra.mxu0 %v2137
        %2975 = vmatprep.subr.bf16.mxu0 %v2140
        %2976 = vmatpush1.bf16.msra.mxu0 %v2139
        %2977 = vmatprep.subr.bf16.mxu0 %v2142
        %2978 = vmatpush1.bf16.msra.mxu0 %v2141
        %2979 = vmatprep.subr.bf16.mxu0 %v2144
        %2980 = vmatpush1.bf16.msra.mxu0 %v2143
        %2981 = vmatprep.subr.bf16.mxu0 %v2146
        %2982 = vmatpush1.bf16.msra.mxu0 %v2145
        %2983 = vmatprep.subr.bf16.mxu0 %v2148
        %2984 = vmatpush1.bf16.msra.mxu0 %v2147
        %2985 = vmatprep.subr.bf16.mxu0 %v2150
        %2986 = vmatpush1.bf16.msra.mxu0 %v2149
        %2987 = vmatprep.subr.bf16.mxu0 %v2152
        %2988 = vmatpush1.bf16.msra.mxu0 %v2151
        %2989 = vmatprep.subr.bf16.mxu0 %v2154
        %2990 = vmatpush1.bf16.msra.mxu0 %v2153
        %2991 = vmatprep.subr.bf16.mxu0 %v2156
        %2992 = vmatpush1.bf16.msra.mxu0 %v2155
        %2993 = vmatprep.subr.bf16.mxu0 %v2158
        %2994 = vmatpush1.bf16.msra.mxu0 %v2157
        %2995 = vmatprep.mubr.bf16.mxu0 %v984
        %2996 = vmatmul.mubr.bf16.gmra.mrb[0].mxu0 %v983
        %v2997 = vpop.f32.mrb[0].mxu0
        %v2998 = vadd.f32 %v2885, %v2997
        %v2999 = vpop.f32.mrb[0].mxu0
        %v3000 = vadd.f32 %v2887, %v2999
        %v3001 = vpop.f32.mrb[0].mxu0
        %v3002 = vadd.f32 %v2889, %v3001
        %v3003 = vpop.f32.mrb[0].mxu0
        %v3004 = vadd.f32 %v2891, %v3003
        %3005 = vmatprep.mubr.bf16.mxu0 %v1000
        %3006 = vmatmul.mubr.bf16.gmra.mrb[0].mxu0 %v999
        %v3007 = vpop.f32.mrb[0].mxu0
        %v3008 = vadd.f32 %v2895, %v3007
        %v3009 = vpop.f32.mrb[0].mxu0
        %v3010 = vadd.f32 %v2897, %v3009
        %v3011 = vpop.f32.mrb[0].mxu0
        %v3012 = vadd.f32 %v2899, %v3011
        %v3013 = vpop.f32.mrb[0].mxu0
        %v3014 = vadd.f32 %v2901, %v3013
        %3015 = vmatprep.mubr.bf16.mxu0 %v1016
        %3016 = vmatmul.mubr.bf16.gmra.mrb[0].mxu0 %v1015
        %v3017 = vpop.f32.mrb[0].mxu0
        %v3018 = vadd.f32 %v2905, %v3017
        %v3019 = vpop.f32.mrb[0].mxu0
        %v3020 = vadd.f32 %v2907, %v3019
        %v3021 = vpop.f32.mrb[0].mxu0
        %v3022 = vadd.f32 %v2909, %v3021
        %v3023 = vpop.f32.mrb[0].mxu0
        %v3024 = vadd.f32 %v2911, %v3023
        %3025 = vmatprep.mubr.bf16.mxu0 %v1032
        %3026 = vmatmul.mubr.bf16.gmra.mrb[0].mxu0 %v1031
        %v3027 = vpop.f32.mrb[0].mxu0
        %v3028 = vadd.f32 %v2915, %v3027
        %v3029 = vpop.f32.mrb[0].mxu0
        %v3030 = vadd.f32 %v2917, %v3029
        %v3031 = vpop.f32.mrb[0].mxu0
        %v3032 = vadd.f32 %v2919, %v3031
        %v3033 = vpop.f32.mrb[0].mxu0
        %v3034 = vadd.f32 %v2921, %v3033
        %3035 = vmatprep.mubr.bf16.mxu0 %v1048
        %3036 = vmatmul.mubr.bf16.gmra.mrb[0].mxu0 %v1047
        %v3037 = vpop.f32.mrb[0].mxu0
        %v3038 = vadd.f32 %v2925, %v3037
        %v3039 = vpop.f32.mrb[0].mxu0
        %v3040 = vadd.f32 %v2927, %v3039
        %v3041 = vpop.f32.mrb[0].mxu0
        %v3042 = vadd.f32 %v2929, %v3041
        %v3043 = vpop.f32.mrb[0].mxu0
        %v3044 = vadd.f32 %v2931, %v3043
        %3045 = vmatprep.mubr.bf16.mxu0 %v1064
        %3046 = vmatmul.mubr.bf16.gmra.mrb[0].mxu0 %v1063
        %v3047 = vpop.f32.mrb[0].mxu0
        %v3048 = vadd.f32 %v2935, %v3047
        %v3049 = vpop.f32.mrb[0].mxu0
        %v3050 = vadd.f32 %v2937, %v3049
        %v3051 = vpop.f32.mrb[0].mxu0
        %v3052 = vadd.f32 %v2939, %v3051
        %v3053 = vpop.f32.mrb[0].mxu0
        %v3054 = vadd.f32 %v2941, %v3053
        %3055 = vmatprep.mubr.bf16.mxu0 %v1080
        %3056 = vmatmul.mubr.bf16.gmra.mrb[0].mxu0 %v1079
        %v3057 = vpop.f32.mrb[0].mxu0
        %v3058 = vadd.f32 %v2945, %v3057
        %v3059 = vpop.f32.mrb[0].mxu0
        %v3060 = vadd.f32 %v2947, %v3059
        %v3061 = vpop.f32.mrb[0].mxu0
        %v3062 = vadd.f32 %v2949, %v3061
        %v3063 = vpop.f32.mrb[0].mxu0
        %v3064 = vadd.f32 %v2951, %v3063
        %3065 = vmatprep.mubr.bf16.mxu0 %v1096
        %3066 = vmatmul.mubr.bf16.gmra.mrb[0].mxu0 %v1095
        %v3067 = vpop.f32.mrb[0].mxu0
        %v3068 = vadd.f32 %v2955, %v3067
        %v3069 = vpop.f32.mrb[0].mxu0
        %v3070 = vadd.f32 %v2957, %v3069
        %v3071 = vpop.f32.mrb[0].mxu0
        %v3072 = vadd.f32 %v2959, %v3071
        %v3073 = vpop.f32.mrb[0].mxu0
        %v3074 = vadd.f32 %v2961, %v3073
        %3075 = vdwg.mxu0
        %3076 = vmatprep.subr.bf16.mxu0 %v2160
        %3077 = vmatpush1.bf16.msra.mxu0 %v2159
        %3078 = vmatprep.subr.bf16.mxu0 %v2162
        %3079 = vmatpush1.bf16.msra.mxu0 %v2161
        %3080 = vmatprep.subr.bf16.mxu0 %v2164
        %3081 = vmatpush1.bf16.msra.mxu0 %v2163
        %3082 = vmatprep.subr.bf16.mxu0 %v2166
        %3083 = vmatpush1.bf16.msra.mxu0 %v2165
        %3084 = vmatprep.subr.bf16.mxu0 %v2168
        %3085 = vmatpush1.bf16.msra.mxu0 %v2167
        %3086 = vmatprep.subr.bf16.mxu0 %v2170
        %3087 = vmatpush1.bf16.msra.mxu0 %v2169
        %3088 = vmatprep.subr.bf16.mxu0 %v2172
        %3089 = vmatpush1.bf16.msra.mxu0 %v2171
        %3090 = vmatprep.subr.bf16.mxu0 %v2174
        %3091 = vmatpush1.bf16.msra.mxu0 %v2173
        %3092 = vmatprep.subr.bf16.mxu0 %v2176
        %3093 = vmatpush1.bf16.msra.mxu0 %v2175
        %3094 = vmatprep.subr.bf16.mxu0 %v2178
        %3095 = vmatpush1.bf16.msra.mxu0 %v2177
        %3096 = vmatprep.subr.bf16.mxu0 %v2180
        %3097 = vmatpush1.bf16.msra.mxu0 %v2179
        %3098 = vmatprep.subr.bf16.mxu0 %v2182
        %3099 = vmatpush1.bf16.msra.mxu0 %v2181
        %3100 = vmatprep.subr.bf16.mxu0 %v2184
        %3101 = vmatpush1.bf16.msra.mxu0 %v2183
        %3102 = vmatprep.subr.bf16.mxu0 %v2186
        %3103 = vmatpush1.bf16.msra.mxu0 %v2185
        %3104 = vmatprep.subr.bf16.mxu0 %v2188
        %3105 = vmatpush1.bf16.msra.mxu0 %v2187
        %3106 = vmatprep.subr.bf16.mxu0 %v2190
        %3107 = vmatpush1.bf16.msra.mxu0 %v2189
        %3108 = vmatprep.mubr.bf16.mxu0 %v986
        %3109 = vmatmul.mubr.bf16.gmra.mrb[0].mxu0 %v985
        %v3110 = vpop.f32.mrb[0].mxu0
        %v3111 = vadd.f32 %v2998, %v3110
        %v3112 = vpop.f32.mrb[0].mxu0
        %v3113 = vadd.f32 %v3000, %v3112
        %v3114 = vpop.f32.mrb[0].mxu0
        %v3115 = vadd.f32 %v3002, %v3114
        %v3116 = vpop.f32.mrb[0].mxu0
        %v3117 = vadd.f32 %v3004, %v3116
        %3118 = vmatprep.mubr.bf16.mxu0 %v1002
        %3119 = vmatmul.mubr.bf16.gmra.mrb[0].mxu0 %v1001
        %v3120 = vpop.f32.mrb[0].mxu0
        %v3121 = vadd.f32 %v3008, %v3120
        %v3122 = vpop.f32.mrb[0].mxu0
        %v3123 = vadd.f32 %v3010, %v3122
        %v3124 = vpop.f32.mrb[0].mxu0
        %v3125 = vadd.f32 %v3012, %v3124
        %v3126 = vpop.f32.mrb[0].mxu0
        %v3127 = vadd.f32 %v3014, %v3126
        %3128 = vmatprep.mubr.bf16.mxu0 %v1018
        %3129 = vmatmul.mubr.bf16.gmra.mrb[0].mxu0 %v1017
        %v3130 = vpop.f32.mrb[0].mxu0
        %v3131 = vadd.f32 %v3018, %v3130
        %v3132 = vpop.f32.mrb[0].mxu0
        %v3133 = vadd.f32 %v3020, %v3132
        %v3134 = vpop.f32.mrb[0].mxu0
        %v3135 = vadd.f32 %v3022, %v3134
        %v3136 = vpop.f32.mrb[0].mxu0
        %v3137 = vadd.f32 %v3024, %v3136
        %3138 = vmatprep.mubr.bf16.mxu0 %v1034
        %3139 = vmatmul.mubr.bf16.gmra.mrb[0].mxu0 %v1033
        %v3140 = vpop.f32.mrb[0].mxu0
        %v3141 = vadd.f32 %v3028, %v3140
        %v3142 = vpop.f32.mrb[0].mxu0
        %v3143 = vadd.f32 %v3030, %v3142
        %v3144 = vpop.f32.mrb[0].mxu0
        %v3145 = vadd.f32 %v3032, %v3144
        %v3146 = vpop.f32.mrb[0].mxu0
        %v3147 = vadd.f32 %v3034, %v3146
        %3148 = vmatprep.mubr.bf16.mxu0 %v1050
        %3149 = vmatmul.mubr.bf16.gmra.mrb[0].mxu0 %v1049
        %v3150 = vpop.f32.mrb[0].mxu0
        %v3151 = vadd.f32 %v3038, %v3150
        %v3152 = vpop.f32.mrb[0].mxu0
        %v3153 = vadd.f32 %v3040, %v3152
        %v3154 = vpop.f32.mrb[0].mxu0
        %v3155 = vadd.f32 %v3042, %v3154
        %v3156 = vpop.f32.mrb[0].mxu0
        %v3157 = vadd.f32 %v3044, %v3156
        %3158 = vmatprep.mubr.bf16.mxu0 %v1066
        %3159 = vmatmul.mubr.bf16.gmra.mrb[0].mxu0 %v1065
        %v3160 = vpop.f32.mrb[0].mxu0
        %v3161 = vadd.f32 %v3048, %v3160
        %v3162 = vpop.f32.mrb[0].mxu0
        %v3163 = vadd.f32 %v3050, %v3162
        %v3164 = vpop.f32.mrb[0].mxu0
        %v3165 = vadd.f32 %v3052, %v3164
        %v3166 = vpop.f32.mrb[0].mxu0
        %v3167 = vadd.f32 %v3054, %v3166
        %3168 = vmatprep.mubr.bf16.mxu0 %v1082
        %3169 = vmatmul.mubr.bf16.gmra.mrb[0].mxu0 %v1081
        %v3170 = vpop.f32.mrb[0].mxu0
        %v3171 = vadd.f32 %v3058, %v3170
        %v3172 = vpop.f32.mrb[0].mxu0
        %v3173 = vadd.f32 %v3060, %v3172
        %v3174 = vpop.f32.mrb[0].mxu0
        %v3175 = vadd.f32 %v3062, %v3174
        %v3176 = vpop.f32.mrb[0].mxu0
        %v3177 = vadd.f32 %v3064, %v3176
        %3178 = vmatprep.mubr.bf16.mxu0 %v1098
        %3179 = vmatmul.mubr.bf16.gmra.mrb[0].mxu0 %v1097
        %v3180 = vpop.f32.mrb[0].mxu0
        %v3181 = vadd.f32 %v3068, %v3180
        %v3182 = vpop.f32.mrb[0].mxu0
        %v3183 = vadd.f32 %v3070, %v3182
        %v3184 = vpop.f32.mrb[0].mxu0
        %v3185 = vadd.f32 %v3072, %v3184
        %v3186 = vpop.f32.mrb[0].mxu0
        %v3187 = vadd.f32 %v3074, %v3186
        %3188 = vdwg.mxu0
        %3189 = vmatprep.subr.bf16.mxu0 %v2192
        %3190 = vmatpush1.bf16.msra.mxu0 %v2191
        %3191 = vmatprep.subr.bf16.mxu0 %v2194
        %3192 = vmatpush1.bf16.msra.mxu0 %v2193
        %3193 = vmatprep.subr.bf16.mxu0 %v2196
        %3194 = vmatpush1.bf16.msra.mxu0 %v2195
        %3195 = vmatprep.subr.bf16.mxu0 %v2198
        %3196 = vmatpush1.bf16.msra.mxu0 %v2197
        %3197 = vmatprep.subr.bf16.mxu0 %v2200
        %3198 = vmatpush1.bf16.msra.mxu0 %v2199
        %3199 = vmatprep.subr.bf16.mxu0 %v2202
        %3200 = vmatpush1.bf16.msra.mxu0 %v2201
        %3201 = vmatprep.subr.bf16.mxu0 %v2204
        %3202 = vmatpush1.bf16.msra.mxu0 %v2203
        %3203 = vmatprep.subr.bf16.mxu0 %v2206
        %3204 = vmatpush1.bf16.msra.mxu0 %v2205
        %3205 = vmatprep.subr.bf16.mxu0 %v2208
        %3206 = vmatpush1.bf16.msra.mxu0 %v2207
        %3207 = vmatprep.subr.bf16.mxu0 %v2210
        %3208 = vmatpush1.bf16.msra.mxu0 %v2209
        %3209 = vmatprep.subr.bf16.mxu0 %v2212
        %3210 = vmatpush1.bf16.msra.mxu0 %v2211
        %3211 = vmatprep.subr.bf16.mxu0 %v2214
        %3212 = vmatpush1.bf16.msra.mxu0 %v2213
        %3213 = vmatprep.subr.bf16.mxu0 %v2216
        %3214 = vmatpush1.bf16.msra.mxu0 %v2215
        %3215 = vmatprep.subr.bf16.mxu0 %v2218
        %3216 = vmatpush1.bf16.msra.mxu0 %v2217
        %3217 = vmatprep.subr.bf16.mxu0 %v2220
        %3218 = vmatpush1.bf16.msra.mxu0 %v2219
        %3219 = vmatprep.subr.bf16.mxu0 %v2222
        %3220 = vmatpush1.bf16.msra.mxu0 %v2221
        %3221 = vmatprep.mubr.bf16.mxu0 %v988
        %3222 = vmatmul.mubr.bf16.gmra.mrb[0].mxu0 %v987
        %v3223 = vpop.f32.mrb[0].mxu0
        %v3224 = vadd.f32 %v3111, %v3223
        %v3225 = vpop.f32.mrb[0].mxu0
        %v3226 = vadd.f32 %v3113, %v3225
        %v3227 = vpop.f32.mrb[0].mxu0
        %v3228 = vadd.f32 %v3115, %v3227
        %v3229 = vpop.f32.mrb[0].mxu0
        %v3230 = vadd.f32 %v3117, %v3229
        %3231 = vmatprep.mubr.bf16.mxu0 %v1004
        %3232 = vmatmul.mubr.bf16.gmra.mrb[0].mxu0 %v1003
        %v3233 = vpop.f32.mrb[0].mxu0
        %v3234 = vadd.f32 %v3121, %v3233
        %v3235 = vpop.f32.mrb[0].mxu0
        %v3236 = vadd.f32 %v3123, %v3235
        %v3237 = vpop.f32.mrb[0].mxu0
        %v3238 = vadd.f32 %v3125, %v3237
        %v3239 = vpop.f32.mrb[0].mxu0
        %v3240 = vadd.f32 %v3127, %v3239
        %3241 = vmatprep.mubr.bf16.mxu0 %v1020
        %3242 = vmatmul.mubr.bf16.gmra.mrb[0].mxu0 %v1019
        %v3243 = vpop.f32.mrb[0].mxu0
        %v3244 = vadd.f32 %v3131, %v3243
        %v3245 = vpop.f32.mrb[0].mxu0
        %v3246 = vadd.f32 %v3133, %v3245
        %v3247 = vpop.f32.mrb[0].mxu0
        %v3248 = vadd.f32 %v3135, %v3247
        %v3249 = vpop.f32.mrb[0].mxu0
        %v3250 = vadd.f32 %v3137, %v3249
        %3251 = vmatprep.mubr.bf16.mxu0 %v1036
        %3252 = vmatmul.mubr.bf16.gmra.mrb[0].mxu0 %v1035
        %v3253 = vpop.f32.mrb[0].mxu0
        %v3254 = vadd.f32 %v3141, %v3253
        %v3255 = vpop.f32.mrb[0].mxu0
        %v3256 = vadd.f32 %v3143, %v3255
        %v3257 = vpop.f32.mrb[0].mxu0
        %v3258 = vadd.f32 %v3145, %v3257
        %v3259 = vpop.f32.mrb[0].mxu0
        %v3260 = vadd.f32 %v3147, %v3259
        %3261 = vmatprep.mubr.bf16.mxu0 %v1052
        %3262 = vmatmul.mubr.bf16.gmra.mrb[0].mxu0 %v1051
        %v3263 = vpop.f32.mrb[0].mxu0
        %v3264 = vadd.f32 %v3151, %v3263
        %v3265 = vpop.f32.mrb[0].mxu0
        %v3266 = vadd.f32 %v3153, %v3265
        %v3267 = vpop.f32.mrb[0].mxu0
        %v3268 = vadd.f32 %v3155, %v3267
        %v3269 = vpop.f32.mrb[0].mxu0
        %v3270 = vadd.f32 %v3157, %v3269
        %3271 = vmatprep.mubr.bf16.mxu0 %v1068
        %3272 = vmatmul.mubr.bf16.gmra.mrb[0].mxu0 %v1067
        %v3273 = vpop.f32.mrb[0].mxu0
        %v3274 = vadd.f32 %v3161, %v3273
        %v3275 = vpop.f32.mrb[0].mxu0
        %v3276 = vadd.f32 %v3163, %v3275
        %v3277 = vpop.f32.mrb[0].mxu0
        %v3278 = vadd.f32 %v3165, %v3277
        %v3279 = vpop.f32.mrb[0].mxu0
        %v3280 = vadd.f32 %v3167, %v3279
        %3281 = vmatprep.mubr.bf16.mxu0 %v1084
        %3282 = vmatmul.mubr.bf16.gmra.mrb[0].mxu0 %v1083
        %v3283 = vpop.f32.mrb[0].mxu0
        %v3284 = vadd.f32 %v3171, %v3283
        %v3285 = vpop.f32.mrb[0].mxu0
        %v3286 = vadd.f32 %v3173, %v3285
        %v3287 = vpop.f32.mrb[0].mxu0
        %v3288 = vadd.f32 %v3175, %v3287
        %v3289 = vpop.f32.mrb[0].mxu0
        %v3290 = vadd.f32 %v3177, %v3289
        %3291 = vmatprep.mubr.bf16.mxu0 %v1100
        %3292 = vmatmul.mubr.bf16.gmra.mrb[0].mxu0 %v1099
        %v3293 = vpop.f32.mrb[0].mxu0
        %v3294 = vadd.f32 %v3181, %v3293
        %v3295 = vpop.f32.mrb[0].mxu0
        %v3296 = vadd.f32 %v3183, %v3295
        %v3297 = vpop.f32.mrb[0].mxu0
        %v3298 = vadd.f32 %v3185, %v3297
        %v3299 = vpop.f32.mrb[0].mxu0
        %v3300 = vadd.f32 %v3187, %v3299
        %3301 = vdwg.mxu0
        %3302 = vmatprep.subr.bf16.mxu0 %v2224
        %3303 = vmatpush1.bf16.msra.mxu0 %v2223
        %3304 = vmatprep.subr.bf16.mxu0 %v2226
        %3305 = vmatpush1.bf16.msra.mxu0 %v2225
        %3306 = vmatprep.subr.bf16.mxu0 %v2228
        %3307 = vmatpush1.bf16.msra.mxu0 %v2227
        %3308 = vmatprep.subr.bf16.mxu0 %v2230
        %3309 = vmatpush1.bf16.msra.mxu0 %v2229
        %3310 = vmatprep.subr.bf16.mxu0 %v2232
        %3311 = vmatpush1.bf16.msra.mxu0 %v2231
        %3312 = vmatprep.subr.bf16.mxu0 %v2234
        %3313 = vmatpush1.bf16.msra.mxu0 %v2233
        %3314 = vmatprep.subr.bf16.mxu0 %v2236
        %3315 = vmatpush1.bf16.msra.mxu0 %v2235
        %3316 = vmatprep.subr.bf16.mxu0 %v2238
        %3317 = vmatpush1.bf16.msra.mxu0 %v2237
        %3318 = vmatprep.subr.bf16.mxu0 %v2240
        %3319 = vmatpush1.bf16.msra.mxu0 %v2239
        %3320 = vmatprep.subr.bf16.mxu0 %v2242
        %3321 = vmatpush1.bf16.msra.mxu0 %v2241
        %3322 = vmatprep.subr.bf16.mxu0 %v2244
        %3323 = vmatpush1.bf16.msra.mxu0 %v2243
        %3324 = vmatprep.subr.bf16.mxu0 %v2246
        %3325 = vmatpush1.bf16.msra.mxu0 %v2245
        %3326 = vmatprep.subr.bf16.mxu0 %v2248
        %3327 = vmatpush1.bf16.msra.mxu0 %v2247
        %3328 = vmatprep.subr.bf16.mxu0 %v2250
        %3329 = vmatpush1.bf16.msra.mxu0 %v2249
        %3330 = vmatprep.subr.bf16.mxu0 %v2252
        %3331 = vmatpush1.bf16.msra.mxu0 %v2251
        %3332 = vmatprep.subr.bf16.mxu0 %v2254
        %3333 = vmatpush1.bf16.msra.mxu0 %v2253
        %3334 = vmatprep.mubr.bf16.mxu0 %v990
        %3335 = vmatmul.mubr.bf16.gmra.mrb[0].mxu0 %v989
        %v3336 = vpop.f32.mrb[0].mxu0
        %v3337 = vadd.f32 %v3224, %v3336
        %v3338 = vpop.f32.mrb[0].mxu0
        %v3339 = vadd.f32 %v3226, %v3338
        %v3340 = vpop.f32.mrb[0].mxu0
        %v3341 = vadd.f32 %v3228, %v3340
        %v3342 = vpop.f32.mrb[0].mxu0
        %v3343 = vadd.f32 %v3230, %v3342
        %3344 = vmatprep.mubr.bf16.mxu0 %v1006
        %3345 = vmatmul.mubr.bf16.gmra.mrb[0].mxu0 %v1005
        %v3346 = vpop.f32.mrb[0].mxu0
        %v3347 = vadd.f32 %v3234, %v3346
        %v3348 = vpop.f32.mrb[0].mxu0
        %v3349 = vadd.f32 %v3236, %v3348
        %v3350 = vpop.f32.mrb[0].mxu0
        %v3351 = vadd.f32 %v3238, %v3350
        %v3352 = vpop.f32.mrb[0].mxu0
        %v3353 = vadd.f32 %v3240, %v3352
        %3354 = vmatprep.mubr.bf16.mxu0 %v1022
        %3355 = vmatmul.mubr.bf16.gmra.mrb[0].mxu0 %v1021
        %v3356 = vpop.f32.mrb[0].mxu0
        %v3357 = vadd.f32 %v3244, %v3356
        %v3358 = vpop.f32.mrb[0].mxu0
        %v3359 = vadd.f32 %v3246, %v3358
        %v3360 = vpop.f32.mrb[0].mxu0
        %v3361 = vadd.f32 %v3248, %v3360
        %v3362 = vpop.f32.mrb[0].mxu0
        %v3363 = vadd.f32 %v3250, %v3362
        %3364 = vmatprep.mubr.bf16.mxu0 %v1038
        %3365 = vmatmul.mubr.bf16.gmra.mrb[0].mxu0 %v1037
        %v3366 = vpop.f32.mrb[0].mxu0
        %v3367 = vadd.f32 %v3254, %v3366
        %v3368 = vpop.f32.mrb[0].mxu0
        %v3369 = vadd.f32 %v3256, %v3368
        %v3370 = vpop.f32.mrb[0].mxu0
        %v3371 = vadd.f32 %v3258, %v3370
        %v3372 = vpop.f32.mrb[0].mxu0
        %v3373 = vadd.f32 %v3260, %v3372
        %3374 = vmatprep.mubr.bf16.mxu0 %v1054
        %3375 = vmatmul.mubr.bf16.gmra.mrb[0].mxu0 %v1053
        %v3376 = vpop.f32.mrb[0].mxu0
        %v3377 = vadd.f32 %v3264, %v3376
        %v3378 = vpop.f32.mrb[0].mxu0
        %v3379 = vadd.f32 %v3266, %v3378
        %v3380 = vpop.f32.mrb[0].mxu0
        %v3381 = vadd.f32 %v3268, %v3380
        %v3382 = vpop.f32.mrb[0].mxu0
        %v3383 = vadd.f32 %v3270, %v3382
        %3384 = vmatprep.mubr.bf16.mxu0 %v1070
        %3385 = vmatmul.mubr.bf16.gmra.mrb[0].mxu0 %v1069
        %v3386 = vpop.f32.mrb[0].mxu0
        %v3387 = vadd.f32 %v3274, %v3386
        %v3388 = vpop.f32.mrb[0].mxu0
        %v3389 = vadd.f32 %v3276, %v3388
        %v3390 = vpop.f32.mrb[0].mxu0
        %v3391 = vadd.f32 %v3278, %v3390
        %v3392 = vpop.f32.mrb[0].mxu0
        %v3393 = vadd.f32 %v3280, %v3392
        %3394 = vmatprep.mubr.bf16.mxu0 %v1086
        %3395 = vmatmul.mubr.bf16.gmra.mrb[0].mxu0 %v1085
        %v3396 = vpop.f32.mrb[0].mxu0
        %v3397 = vadd.f32 %v3284, %v3396
        %v3398 = vpop.f32.mrb[0].mxu0
        %v3399 = vadd.f32 %v3286, %v3398
        %v3400 = vpop.f32.mrb[0].mxu0
        %v3401 = vadd.f32 %v3288, %v3400
        %v3402 = vpop.f32.mrb[0].mxu0
        %v3403 = vadd.f32 %v3290, %v3402
        %3404 = vmatprep.mubr.bf16.mxu0 %v1102
        %3405 = vmatmul.mubr.bf16.gmra.mrb[0].mxu0 %v1101
        %v3406 = vpop.f32.mrb[0].mxu0
        %v3407 = vadd.f32 %v3294, %v3406
        %v3408 = vpop.f32.mrb[0].mxu0
        %v3409 = vadd.f32 %v3296, %v3408
        %v3410 = vpop.f32.mrb[0].mxu0
        %v3411 = vadd.f32 %v3298, %v3410
        %v3412 = vpop.f32.mrb[0].mxu0
        %v3413 = vadd.f32 %v3300, %v3412
        %3414 = vdwg.mxu0
        %v3415 = vadd.f32 %v3337, %v3341
        %v3416 = vadd.f32 %v3415, %v3347
        %v3417 = vadd.f32 %v3416, %v3351
        %v3418 = vadd.f32 %v3417, %v3357
        %v3419 = vadd.f32 %v3418, %v3361
        %v3420 = vadd.f32 %v3419, %v3367
        %v3421 = vadd.f32 %v3420, %v3371
        %v3422 = vadd.f32 %v3421, %v3377
        %v3423 = vadd.f32 %v3422, %v3381
        %v3424 = vadd.f32 %v3423, %v3387
        %v3425 = vadd.f32 %v3424, %v3391
        %v3426 = vadd.f32 %v3425, %v3397
        %v3427 = vadd.f32 %v3426, %v3401
        %v3428 = vadd.f32 %v3427, %v3407
        %v3429 = vadd.f32 %v3428, %v3411
        %v3430 = vrot.slane %v3429, 4
        %v3431 = vadd.f32 %v3429, %v3430
        %v3432 = vrot.slane %v3431, 2
        %v3433 = vadd.f32 %v3431, %v3432
        %v3434 = vrot.slane %v3433, 1
        %v3435 = vadd.f32 %v3433, %v3434
        %v3436 = vadd.f32 %v3339, %v3343
        %v3437 = vadd.f32 %v3436, %v3349
        %v3438 = vadd.f32 %v3437, %v3353
        %v3439 = vadd.f32 %v3438, %v3359
        %v3440 = vadd.f32 %v3439, %v3363
        %v3441 = vadd.f32 %v3440, %v3369
        %v3442 = vadd.f32 %v3441, %v3373
        %v3443 = vadd.f32 %v3442, %v3379
        %v3444 = vadd.f32 %v3443, %v3383
        %v3445 = vadd.f32 %v3444, %v3389
        %v3446 = vadd.f32 %v3445, %v3393
        %v3447 = vadd.f32 %v3446, %v3399
        %v3448 = vadd.f32 %v3447, %v3403
        %v3449 = vadd.f32 %v3448, %v3409
        %v3450 = vadd.f32 %v3449, %v3413
        %v3451 = vrot.slane %v3450, 4
        %v3452 = vadd.f32 %v3450, %v3451
        %v3453 = vrot.slane %v3452, 2
        %v3454 = vadd.f32 %v3452, %v3453
        %v3455 = vrot.slane %v3454, 1
        %v3456 = vadd.f32 %v3454, %v3455
        %v3457 = vmul.f32 %v3435, 0.010204081
        %v3458 = vmul.f32 %v3456, 0.010204081
        %3460 = vbcast.lane.b32.xlu0 %v3457, 256
        %v3461 = vpop.permute.xlu0 %3460
        %s3463 = sor.u32 256, 8
        %3464 = vbcast.lane.b32.xlu0 %v3457, %s3463
        %v3465 = vpop.permute.xlu0 %3464
        %s3467 = sor.u32 256, 16
        %3468 = vbcast.lane.b32.xlu0 %v3457, %s3467
        %v3469 = vpop.permute.xlu0 %3468
        %s3471 = sor.u32 256, 24
        %3472 = vbcast.lane.b32.xlu0 %v3457, %s3471
        %v3473 = vpop.permute.xlu0 %3472
        %s3475 = sor.u32 256, 32
        %3476 = vbcast.lane.b32.xlu0 %v3457, %s3475
        %v3477 = vpop.permute.xlu0 %3476
        %s3479 = sor.u32 256, 40
        %3480 = vbcast.lane.b32.xlu0 %v3457, %s3479
        %v3481 = vpop.permute.xlu0 %3480
        %s3483 = sor.u32 256, 48
        %3484 = vbcast.lane.b32.xlu0 %v3457, %s3483
        %v3485 = vpop.permute.xlu0 %3484
        %s3487 = sor.u32 256, 56
        %3488 = vbcast.lane.b32.xlu0 %v3457, %s3487
        %v3489 = vpop.permute.xlu0 %3488
        %s3491 = sor.u32 256, 64
        %3492 = vbcast.lane.b32.xlu0 %v3457, %s3491
        %v3493 = vpop.permute.xlu0 %3492
        %s3495 = sor.u32 256, 72
        %3496 = vbcast.lane.b32.xlu0 %v3457, %s3495
        %v3497 = vpop.permute.xlu0 %3496
        %s3499 = sor.u32 256, 80
        %3500 = vbcast.lane.b32.xlu0 %v3457, %s3499
        %v3501 = vpop.permute.xlu0 %3500
        %s3503 = sor.u32 256, 88
        %3504 = vbcast.lane.b32.xlu0 %v3457, %s3503
        %v3505 = vpop.permute.xlu0 %3504
        %s3507 = sor.u32 256, 96
        %3508 = vbcast.lane.b32.xlu0 %v3457, %s3507
        %v3509 = vpop.permute.xlu0 %3508
        %s3511 = sor.u32 256, 104
        %3512 = vbcast.lane.b32.xlu0 %v3457, %s3511
        %v3513 = vpop.permute.xlu0 %3512
        %s3515 = sor.u32 256, 112
        %3516 = vbcast.lane.b32.xlu0 %v3457, %s3515
        %v3517 = vpop.permute.xlu0 %3516
        %s3519 = sor.u32 256, 120
        %3520 = vbcast.lane.b32.xlu0 %v3457, %s3519
        %v3521 = vpop.permute.xlu0 %3520
        %3523 = vbcast.lane.b32.xlu0 %v3458, 256
        %v3524 = vpop.permute.xlu0 %3523
        %s3526 = sor.u32 256, 8
        %3527 = vbcast.lane.b32.xlu0 %v3458, %s3526
        %v3528 = vpop.permute.xlu0 %3527
        %s3530 = sor.u32 256, 16
        %3531 = vbcast.lane.b32.xlu0 %v3458, %s3530
        %v3532 = vpop.permute.xlu0 %3531
        %s3534 = sor.u32 256, 24
        %3535 = vbcast.lane.b32.xlu0 %v3458, %s3534
        %v3536 = vpop.permute.xlu0 %3535
        %s3538 = sor.u32 256, 32
        %3539 = vbcast.lane.b32.xlu0 %v3458, %s3538
        %v3540 = vpop.permute.xlu0 %3539
        %s3542 = sor.u32 256, 40
        %3543 = vbcast.lane.b32.xlu0 %v3458, %s3542
        %v3544 = vpop.permute.xlu0 %3543
        %s3546 = sor.u32 256, 48
        %3547 = vbcast.lane.b32.xlu0 %v3458, %s3546
        %v3548 = vpop.permute.xlu0 %3547
        %s3550 = sor.u32 256, 56
        %3551 = vbcast.lane.b32.xlu0 %v3458, %s3550
        %v3552 = vpop.permute.xlu0 %3551
        %s3554 = sor.u32 256, 64
        %3555 = vbcast.lane.b32.xlu0 %v3458, %s3554
        %v3556 = vpop.permute.xlu0 %3555
        %s3558 = sor.u32 256, 72
        %3559 = vbcast.lane.b32.xlu0 %v3458, %s3558
        %v3560 = vpop.permute.xlu0 %3559
        %s3562 = sor.u32 256, 80
        %3563 = vbcast.lane.b32.xlu0 %v3458, %s3562
        %v3564 = vpop.permute.xlu0 %3563
        %s3566 = sor.u32 256, 88
        %3567 = vbcast.lane.b32.xlu0 %v3458, %s3566
        %v3568 = vpop.permute.xlu0 %3567
        %s3570 = sor.u32 256, 96
        %3571 = vbcast.lane.b32.xlu0 %v3458, %s3570
        %v3572 = vpop.permute.xlu0 %3571
        %s3574 = sor.u32 256, 104
        %3575 = vbcast.lane.b32.xlu0 %v3458, %s3574
        %v3576 = vpop.permute.xlu0 %3575
        %s3578 = sor.u32 256, 112
        %3579 = vbcast.lane.b32.xlu0 %v3458, %s3578
        %v3580 = vpop.permute.xlu0 %3579
        %s3582 = sor.u32 256, 120
        %3583 = vbcast.lane.b32.xlu0 %v3458, %s3582
        %v3584 = vpop.permute.xlu0 %3583
        %vm3585 = vcmask 7168
        %3586 = vst.msk [vmem:[%s205] sm:$0xff] %vm3585, %v3461
        %3587 = vst.msk [vmem:[%s205 + $0x8] sm:$0xff] %vm3585, %v3465
        %3588 = vst.msk [vmem:[%s205 + $0x10] sm:$0xff] %vm3585, %v3469
        %3589 = vst.msk [vmem:[%s205 + $0x18] sm:$0xff] %vm3585, %v3473
        %3590 = vst.msk [vmem:[%s205 + $0x20] sm:$0xff] %vm3585, %v3477
        %3591 = vst.msk [vmem:[%s205 + $0x28] sm:$0xff] %vm3585, %v3481
        %3592 = vst.msk [vmem:[%s205 + $0x30] sm:$0xff] %vm3585, %v3485
        %3593 = vst.msk [vmem:[%s205 + $0x38] sm:$0xff] %vm3585, %v3489
        %3594 = vst.msk [vmem:[%s205 + $0x40] sm:$0xff] %vm3585, %v3493
        %3595 = vst.msk [vmem:[%s205 + $0x48] sm:$0xff] %vm3585, %v3497
        %3596 = vst.msk [vmem:[%s205 + $0x50] sm:$0xff] %vm3585, %v3501
        %3597 = vst.msk [vmem:[%s205 + $0x58] sm:$0xff] %vm3585, %v3505
        %3598 = vst.msk [vmem:[%s205 + $0x60] sm:$0xff] %vm3585, %v3509
        %3599 = vst.msk [vmem:[%s205 + $0x68] sm:$0xff] %vm3585, %v3513
        %3600 = vst.msk [vmem:[%s205 + $0x70] sm:$0xff] %vm3585, %v3517
        %3601 = vst.msk [vmem:[%s205 + $0x78] sm:$0xff] %vm3585, %v3521
        %3602 = vst.msk [vmem:[%s205 + $0x80] sm:$0xff] %vm3585, %v3524
        %3603 = vst.msk [vmem:[%s205 + $0x88] sm:$0xff] %vm3585, %v3528
        %3604 = vst.msk [vmem:[%s205 + $0x90] sm:$0xff] %vm3585, %v3532
        %3605 = vst.msk [vmem:[%s205 + $0x98] sm:$0xff] %vm3585, %v3536
        %3606 = vst.msk [vmem:[%s205 + $0xa0] sm:$0xff] %vm3585, %v3540
        %3607 = vst.msk [vmem:[%s205 + $0xa8] sm:$0xff] %vm3585, %v3544
        %3608 = vst.msk [vmem:[%s205 + $0xb0] sm:$0xff] %vm3585, %v3548
        %3609 = vst.msk [vmem:[%s205 + $0xb8] sm:$0xff] %vm3585, %v3552
        %3610 = vst.msk [vmem:[%s205 + $0xc0] sm:$0xff] %vm3585, %v3556
        %3611 = vst.msk [vmem:[%s205 + $0xc8] sm:$0xff] %vm3585, %v3560
        %3612 = vst.msk [vmem:[%s205 + $0xd0] sm:$0xff] %vm3585, %v3564
        %3613 = vst.msk [vmem:[%s205 + $0xd8] sm:$0xff] %vm3585, %v3568
        %3614 = vst.msk [vmem:[%s205 + $0xe0] sm:$0xff] %vm3585, %v3572
        %3615 = vst.msk [vmem:[%s205 + $0xe8] sm:$0xff] %vm3585, %v3576
        %3616 = vst.msk [vmem:[%s205 + $0xf0] sm:$0xff] %vm3585, %v3580
        %3617 = vst.msk [vmem:[%s205 + $0xf8] sm:$0xff] %vm3585, %v3584
        %s3618 = smul.u32 32, %s22
        %p3619 = scmp.lt.s32.totalorder %s21, 1
        %s3620 = scalar_select %p3619, %s21, 1
        %p3621 = scmp.lt.s32.totalorder %s3618, 31
        %s3622 = scalar_select %p3621, %s3618, 31
        %s3623 = smul.addr %s3620, 32
        %s3624 = sadd.s32 %s3622, %s3623
        %s3625 = smul.addr %s3624, 8
        %s3626 = scalar_lea.vmem %s2, %s3625
        // Predicated region
        $region37: #{tpu_custom_call.1} parent=27 // pred_check
          %p3627 = pneg %p98
        $region38: #{tpu_custom_call.1} parent=27 // pred_check_branch
          %3629 = sbr.rel (%p3627) target = $region40
        $region39: #{tpu_custom_call.1} parent=27 // pred_region
          %s3630 = smul.u32 32, %s22
        $region40: #{tpu_custom_call.1} parent=27 // pred_fallthru
          _
      $region28: #{tpu_custom_call.1} parent=5 // pred_fallthru
        _
      %p3631 = scmp.le.s32.totalorder 2, %s12
      // Predicated region
      $region41: #{tpu_custom_call.1} parent=5 // pred_check
        %p3632 = pneg %p3631
      $region42: #{tpu_custom_call.1} parent=5 // pred_check_branch
        %3634 = sbr.rel (%p3632) target = $region44
      $region43: #{tpu_custom_call.1} parent=5 // pred_region
        %s3635 = ssub.s32 %s12, 2
        // Predicated region
        $region45: #{tpu_custom_call.1} parent=43 // pred_check
          %p3636 = pneg %p104
        $region46: #{tpu_custom_call.1} parent=43 // pred_check_branch
          %3638 = sbr.rel (%p3636) target = $region48
        $region47: #{tpu_custom_call.1} parent=43 // pred_region
          %s3639 = smul.u32 32, %s24
          %p3640 = scmp.lt.s32.totalorder %s23, 1
          %s3641 = scalar_select %p3640, %s23, 1
          %p3642 = scmp.lt.s32.totalorder %s3639, 31
          %s3643 = scalar_select %p3642, %s3639, 31
          %s3644 = smul.addr %s3641, 32
          %s3645 = sadd.s32 %s3643, %s3644
          %s3646 = smul.addr %s3645, 8
          %s3647 = scalar_lea.vmem %s2, %s3646
        $region48: #{tpu_custom_call.1} parent=43 // pred_fallthru
          _
      $region44: #{tpu_custom_call.1} parent=5 // pred_fallthru
        _
    $region6: #{tpu_custom_call.1} parent=1 // loop_footer
      %s16 = sadd.s32 1, %s12
    $region7: #{tpu_custom_call.1} parent=1 // loop_footer_branch
      %11 = sbr.rel target = $region3
    $region8: #{tpu_custom_call.1} parent=1 // loop_exit
      _
    %3648 = vsyncpa [#allocation3], 1
    %s3649 = scalar_lea.sflag [#allocation3], 1
    %3650 = vsyncpa %s3649, 1
    %3651 = vsyncpa [#allocation5], 1
    %s3652 = scalar_lea.sflag [#allocation5], 1
    %3653 = vsyncpa %s3652, 1

</llo_original>
